<compile_context>
chip_gen: v7x
topology: tpu7x:2x2x1
jax: 0.10.0
libtpu: 0.0.40
codegen_flags: <defaults>
</compile_context>

<pallas_src>
import math

import jax
import jax.numpy as jnp
from jax.experimental import pallas as pl
from jax.experimental.pallas import tpu as pltpu


def _round_up(a, b):
    return ((a + b - 1) // b) * b


def _cdiv(a, b):
    return (a + b - 1) // b


def _gat_kernel_factory(n_head, f_out):
    def kernel(ns_src_ref, ns_dst_ref, adj_ref, h_ref, out_ref, acc_ref):
        c = pl.program_id(1)
        n_c = pl.num_programs(1)

        @pl.when(c == 0)
        def _init():
            acc_ref[...] = jnp.zeros_like(acc_ref)

        mask = adj_ref[...] != 0                      # (TR, TC) from int8 0/1
        ns_src = ns_src_ref[...]                      # (TR, n_head) f32
        ns_dst = ns_dst_ref[...]                      # (n_head, TC) f32

        # NOTE: heads are a short unrolled Python loop (n_head <= 4 here); switch to
        # lax.fori_loop if n_head grows, to bound vreg / Mosaic-scratch pressure.
        for i in range(n_head):
            # -scores = -(h[r]·a_src + h[c]·a_dst)   (broadcast add, f32)
            nscores = ns_src[:, i:i + 1] + ns_dst[i:i + 1, :]          # (TR, TC)
            # -leaky_relu(scores) = min(-scores, 0.2 * (-scores))
            nl = jnp.minimum(nscores, 0.2 * nscores)
            # mask inside the exponent: non-edges underflow to exactly 0, never inf*0
            e = jnp.exp(jnp.where(mask, nl, -1e30).astype(jnp.bfloat16))  # (TR, TC) bf16
            # fused aggregation + rowsum: last column of h_ref is ones
            acc_ref[i] += jnp.dot(e, h_ref[i],
                                  preferred_element_type=jnp.float32)     # (TR, f_out+1)

        @pl.when(c == n_c - 1)
        def _finalize():
            acc = acc_ref[...]                                            # (H, TR, f_out+1)
            # TODO(synk): rows with no edges divide by 0 (same as the PyTorch reference).
            inv = pl.reciprocal(acc[:, :, f_out:f_out + 1], approx=True)  # (H, TR, 1)
            out_ref[...] = (acc[:, :, :f_out] * inv).astype(out_ref.dtype)

    return kernel


def multi_head_graph_attention(x, adj_mask, w, a_src_dst, *, diag=True,
                               bias=None, tile_rows=256, tile_cols=1024):
    """x: (N, f_in) f32; adj_mask: (N, N) 0/1; w: (n_head, 1, f_out) if diag else
    (n_head, f_in, f_out); a_src_dst: (n_head, 2*f_out, 1).
    Returns (n_head, N, f_out) f32 (eval semantics)."""
    N, f_in = x.shape
    n_head = w.shape[0]
    f_out = w.shape[-1]
    if diag:
        assert f_in == f_out and w.shape[1] == 1, "diag=True requires f_in == f_out"

    x = x.astype(jnp.float32)
    w = w.astype(jnp.float32)
    a = a_src_dst[:, :, 0].astype(jnp.float32)         # (n_head, 2*f_out)
    a_src = a[:, :f_out]                               # (n_head, f_out)
    a_dst = a[:, f_out:]                               # (n_head, f_out)

    # --- hoisted projection + score vectors (O(N*f), done once by XLA) ---
    if diag:
        h = w * x[None, :, :]                          # (n_head, N, f_out)
    else:
        h = jnp.einsum('nf,hfo->hno', x, w)            # (n_head, N, f_out)
    ns_src = -jnp.einsum('hno,ho->hn', h, a_src).T     # (N, n_head) f32
    ns_dst = -jnp.einsum('hno,ho->hn', h, a_dst)       # (n_head, N) f32
    # ones column so that e @ [h | 1] also yields the row-sum (free MXU lanes)
    h_aug = jnp.concatenate(
        [h, jnp.ones((n_head, N, 1), jnp.float32)], axis=-1).astype(jnp.bfloat16)

    # --- tile sizes: tr multiple of 32 (int8 adj tile), tc multiple of 128 ---
    tr = _round_up(min(tile_rows, N), 32)
    if _cdiv(N, tr) < 2 and N > 32:
        tr = _round_up(_cdiv(N, 2), 32)    # v7x megacore: keep >= 2 row tiles
    tc = _round_up(min(tile_cols, N), 128)
    n_pad_r = _round_up(N, tr)
    n_pad_c = _round_up(N, tc)

    adj_pad = jnp.pad(adj_mask, ((0, n_pad_r - N), (0, n_pad_c - N)))
    adj_pad = (adj_pad != 0).astype(jnp.int8)          # 0/1 mask: 1 B/elem HBM stream
    ns_src = jnp.pad(ns_src, ((0, n_pad_r - N), (0, 0)))
    ns_dst = jnp.pad(ns_dst, ((0, 0), (0, n_pad_c - N)))
    h_aug = jnp.pad(h_aug, ((0, 0), (0, n_pad_c - N), (0, 0)))

    grid = (n_pad_r // tr, n_pad_c // tc)
    kernel = _gat_kernel_factory(n_head, f_out)

    out = pl.pallas_call(
        kernel,
        out_shape=jax.ShapeDtypeStruct((n_head, n_pad_r, f_out), jnp.float32),
        grid_spec=pltpu.PrefetchScalarGridSpec(
            num_scalar_prefetch=0,
            grid=grid,
            in_specs=[
                pl.BlockSpec((tr, n_head), lambda r, c: (r, 0)),                # -s_src
                pl.BlockSpec((n_head, tc), lambda r, c: (0, c)),                # -s_dst
                pl.BlockSpec((tr, tc), lambda r, c: (r, c)),                    # adj (int8)
                pl.BlockSpec((n_head, tc, f_out + 1), lambda r, c: (0, c, 0)),  # [h | 1]
            ],
            out_specs=pl.BlockSpec((n_head, tr, f_out), lambda r, c: (0, r, 0)),
            scratch_shapes=[
                pltpu.VMEM((n_head, tr, f_out + 1), jnp.float32),  # acc = [sum e@h | rowsum]
            ],
        ),
        compiler_params=pltpu.CompilerParams(
            dimension_semantics=("parallel", "arbitrary"),
            vmem_limit_bytes=48 * 1024 * 1024,
        ),
    )(ns_src, ns_dst, adj_pad, h_aug)

    out = out[:, :N, :]
    if bias is not None:
        out = out + bias
    return out


def _reference(x, adj_mask, w, a_src_dst, diag=True):
    """Pure-JAX reference mirroring the PyTorch forward (eval mode)."""
    n_head = w.shape[0]
    f_out = w.shape[-1]
    edge = adj_mask > 0
    outs = []
    for i in range(n_head):
        h = x * w[i] if diag else x @ w[i]
        a_src = a_src_dst[i, :f_out, 0]
        a_dst = a_src_dst[i, f_out:, 0]
        scores = (h @ a_src)[:, None] + (h @ a_dst)[None, :]
        lrelu = jnp.where(scores >= 0, scores, 0.2 * scores)
        e = jnp.where(edge, jnp.exp(-lrelu), 0.0)
        rowsum = e.sum(axis=1, keepdims=True)
        outs.append((e @ h) / rowsum)
    return jnp.stack(outs, axis=0)


def _xavier_uniform(key, shape):
    fan_in, fan_out = shape[-2], shape[-1]
    bound = math.sqrt(6.0 / (fan_in + fan_out))
    return jax.random.uniform(key, shape, jnp.float32, -bound, bound)


def _make_case(key, n_head, N, f_in, f_out, diag):
    k_x, k_adj, k_w, k_a = jax.random.split(key, 4)
    w = _xavier_uniform(k_w, (n_head, 1 if diag else f_in, f_out))
    a_src_dst = _xavier_uniform(k_a, (n_head, 2 * f_out, 1))
    x = jax.random.normal(k_x, (N, f_in), jnp.float32)
    adj = (jax.random.uniform(k_adj, (N, N)) < 0.1).astype(jnp.float32)
    adj = jnp.maximum(adj, jnp.eye(N, dtype=jnp.float32))  # self loops
    return x, adj, w, a_src_dst


if __name__ == "__main__":
    key = jax.random.PRNGKey(0)
    k1, k2 = jax.random.split(key)

    # case 1: diag head, tiles divide N -> grid (4, 2)
    x, adj, w, a = _make_case(k1, n_head=2, N=512, f_in=16, f_out=16, diag=True)
    out = multi_head_graph_attention(x, adj, w, a, diag=True,
                                     tile_rows=128, tile_cols=256)
    out = jax.block_until_ready(out)
    ref = _reference(x, adj, w, a, diag=True)
    assert out.shape == (2, 512, 16)
    assert bool(jnp.all(jnp.isfinite(out)))
    assert jnp.allclose(out, ref, atol=1e-2, rtol=1e-2), (
        "diag mismatch, max abs err %f" % float(jnp.max(jnp.abs(out - ref))))

    # case 2: dense projection (diag=False), N not a multiple of the tiles (padding path)
    x, adj, w, a = _make_case(k2, n_head=2, N=200, f_in=32, f_out=16, diag=False)
    out = multi_head_graph_attention(x, adj, w, a, diag=False,
                                     tile_rows=128, tile_cols=128)
    out = jax.block_until_ready(out)
    ref = _reference(x, adj, w, a, diag=False)
    assert out.shape == (2, 200, 16)
    assert bool(jnp.all(jnp.isfinite(out)))
    assert jnp.allclose(out, ref, atol=1e-2, rtol=1e-2), (
        "non-diag mismatch, max abs err %f" % float(jnp.max(jnp.abs(out - ref))))

    # case 3: default (larger) tiles, exercises tr=256 / tc=512-capped-to-N path
    out = multi_head_graph_attention(*_make_case(k1, 2, 512, 16, 16, True)[:4], diag=True)
    jax.block_until_ready(out)

    print("KERNEL_OK")
</pallas_src>

<mosaic_0001>
module attributes {stable_mosaic.version = 11 : i64} {
  func.func @kernel(%arg0: i32, %arg1: i32, %arg2: memref<128x2xf32, #tpu.memory_space<vmem>>, %arg3: memref<2x256xf32, #tpu.memory_space<vmem>>, %arg4: memref<128x256xi8, #tpu.memory_space<vmem>>, %arg5: memref<2x256x17xbf16, #tpu.memory_space<vmem>>, %arg6: memref<2x128x16xf32, #tpu.memory_space<vmem>>, %arg7: memref<2x128x17xf32, #tpu.memory_space<vmem>>) attributes {dimension_semantics = [#tpu.dimension_semantics<parallel>, #tpu.dimension_semantics<arbitrary>], iteration_bounds = array<i64: 4, 2>, scalar_prefetch = 0 : i64, scratch_operands = 1 : i64, tpu.core_type = #tpu.core_type<tc>, window_params = [{transform_indices = @transform_0, window_bounds = array<i64: 128, 2>}, {transform_indices = @transform_1, window_bounds = array<i64: 2, 256>}, {transform_indices = @transform_2, window_bounds = array<i64: 128, 256>}, {transform_indices = @transform_3, window_bounds = array<i64: 2, 256, 17>}, {transform_indices = @transform_4, window_bounds = array<i64: 2, 128, 16>}]} {
    %c0_i32 = arith.constant 0 : i32
    %0 = arith.cmpi eq, %arg1, %c0_i32 : i32
    %1 = arith.extui %0 : i1 to i32
    %c0_i32_0 = arith.constant 0 : i32
    %2 = arith.cmpi ne, %1, %c0_i32_0 : i32
    scf.if %2 {
      %cst_29 = arith.constant 0.000000e+00 : f32
      %53 = vector.broadcast %cst_29 : f32 to vector<2x128x17xf32>
      %c0_30 = arith.constant 0 : index
      %c0_31 = arith.constant 0 : index
      %c0_32 = arith.constant 0 : index
      %54 = vector.load %arg7[%c0_30, %c0_31, %c0_32] : memref<2x128x17xf32, #tpu.memory_space<vmem>>, vector<2x128x17xf32>
      tpu.vector_store %arg7[%c0_30, %c0_31, %c0_32], %53 {strides = array<i32>} : memref<2x128x17xf32, #tpu.memory_space<vmem>>, vector<2x128x17xf32>,
    } else {
    }
    %c0 = arith.constant 0 : index
    %c0_1 = arith.constant 0 : index
    %3 = vector.load %arg4[%c0, %c0_1] : memref<128x256xi8, #tpu.memory_space<vmem>>, vector<128x256xi8>
    %c0_i8 = arith.constant 0 : i8
    %4 = vector.broadcast %c0_i8 : i8 to vector<128x256xi8>
    %5 = arith.cmpi ne, %3, %4 : vector<128x256xi8>
    %c0_2 = arith.constant 0 : index
    %c0_3 = arith.constant 0 : index
    %6 = vector.load %arg2[%c0_2, %c0_3] : memref<128x2xf32, #tpu.memory_space<vmem>>, vector<128x2xf32>
    %c0_4 = arith.constant 0 : index
    %c0_5 = arith.constant 0 : index
    %7 = vector.load %arg3[%c0_4, %c0_5] : memref<2x256xf32, #tpu.memory_space<vmem>>, vector<2x256xf32>
    %8 = vector.extract_strided_slice %6 {offsets = [0, 0], sizes = [128, 1], strides = [1, 1]} : vector<128x2xf32> to vector<128x1xf32>
    %9 = vector.extract_strided_slice %7 {offsets = [0, 0], sizes = [1, 256], strides = [1, 1]} : vector<2x256xf32> to vector<1x256xf32>
    %10 = vector.broadcast %8 : vector<128x1xf32> to vector<128x256xf32>
    %11 = vector.broadcast %9 : vector<1x256xf32> to vector<128x256xf32>
    %12 = arith.addf %10, %11 : vector<128x256xf32>
    %cst = arith.constant 2.000000e-01 : f32
    %13 = vector.broadcast %cst : f32 to vector<128x256xf32>
    %14 = arith.mulf %13, %12 : vector<128x256xf32>
    %15 = arith.minimumf %12, %14 : vector<128x256xf32>
    %cst_6 = arith.constant -1.000000e+30 : f32
    %16 = vector.broadcast %cst_6 : f32 to vector<128x256xf32>
    %17 = arith.select %5, %15, %16 : vector<128x256xi1>, vector<128x256xf32>
    %18 = arith.truncf %17 : vector<128x256xf32> to vector<128x256xbf16>
    %19 = math.exp %18 : vector<128x256xbf16>
    %c0_7 = arith.constant 0 : index
    %c0_8 = arith.constant 0 : index
    %c0_9 = arith.constant 0 : index
    %20 = vector.load %arg7[%c0_7, %c0_8, %c0_9] : memref<2x128x17xf32, #tpu.memory_space<vmem>>, vector<1x128x17xf32>
    %21 = vector.shape_cast %20 : vector<1x128x17xf32> to vector<128x17xf32>
    %c0_10 = arith.constant 0 : index
    %c0_11 = arith.constant 0 : index
    %c0_12 = arith.constant 0 : index
    %22 = vector.load %arg5[%c0_10, %c0_11, %c0_12] : memref<2x256x17xbf16, #tpu.memory_space<vmem>>, vector<1x256x17xbf16>
    %23 = vector.shape_cast %22 : vector<1x256x17xbf16> to vector<256x17xbf16>
    %cst_13 = arith.constant dense<0.000000e+00> : vector<128x17xf32>
    %24 = tpu.matmul %19, %23, %cst_13 {dimension_numbers = #tpu.dot_dimension_numbers<[1], [0], [0], [1], [0, 0, 1, 1], [], []>} : vector<128x256xbf16>, vector<256x17xbf16>, vector<128x17xf32> -> vector<128x17xf32>
    %25 = arith.addf %21, %24 : vector<128x17xf32>
    %c0_14 = arith.constant 0 : index
    %c0_15 = arith.constant 0 : index
    %c0_16 = arith.constant 0 : index
    %26 = vector.load %arg7[%c0_14, %c0_15, %c0_16] : memref<2x128x17xf32, #tpu.memory_space<vmem>>, vector<1x128x17xf32>
    %27 = vector.shape_cast %26 : vector<1x128x17xf32> to vector<128x17xf32>
    %28 = vector.shape_cast %25 : vector<128x17xf32> to vector<1x128x17xf32>
    tpu.vector_store %arg7[%c0_14, %c0_15, %c0_16], %28 {strides = array<i32>} : memref<2x128x17xf32, #tpu.memory_space<vmem>>, vector<1x128x17xf32>,
    %29 = vector.extract_strided_slice %6 {offsets = [0, 1], sizes = [128, 1], strides = [1, 1]} : vector<128x2xf32> to vector<128x1xf32>
    %30 = vector.extract_strided_slice %7 {offsets = [1, 0], sizes = [1, 256], strides = [1, 1]} : vector<2x256xf32> to vector<1x256xf32>
    %31 = vector.broadcast %29 : vector<128x1xf32> to vector<128x256xf32>
    %32 = vector.broadcast %30 : vector<1x256xf32> to vector<128x256xf32>
    %33 = arith.addf %31, %32 : vector<128x256xf32>
    %cst_17 = arith.constant 2.000000e-01 : f32
    %34 = vector.broadcast %cst_17 : f32 to vector<128x256xf32>
    %35 = arith.mulf %34, %33 : vector<128x256xf32>
    %36 = arith.minimumf %33, %35 : vector<128x256xf32>
    %cst_18 = arith.constant -1.000000e+30 : f32
    %37 = vector.broadcast %cst_18 : f32 to vector<128x256xf32>
    %38 = arith.select %5, %36, %37 : vector<128x256xi1>, vector<128x256xf32>
    %39 = arith.truncf %38 : vector<128x256xf32> to vector<128x256xbf16>
    %40 = math.exp %39 : vector<128x256xbf16>
    %c1 = arith.constant 1 : index
    %c0_19 = arith.constant 0 : index
    %c0_20 = arith.constant 0 : index
    %41 = vector.load %arg7[%c1, %c0_19, %c0_20] : memref<2x128x17xf32, #tpu.memory_space<vmem>>, vector<1x128x17xf32>
    %42 = vector.shape_cast %41 : vector<1x128x17xf32> to vector<128x17xf32>
    %c1_21 = arith.constant 1 : index
    %c0_22 = arith.constant 0 : index
    %c0_23 = arith.constant 0 : index
    %43 = vector.load %arg5[%c1_21, %c0_22, %c0_23] : memref<2x256x17xbf16, #tpu.memory_space<vmem>>, vector<1x256x17xbf16>
    %44 = vector.shape_cast %43 : vector<1x256x17xbf16> to vector<256x17xbf16>
    %cst_24 = arith.constant dense<0.000000e+00> : vector<128x17xf32>
    %45 = tpu.matmul %40, %44, %cst_24 {dimension_numbers = #tpu.dot_dimension_numbers<[1], [0], [0], [1], [0, 0, 1, 1], [], []>} : vector<128x256xbf16>, vector<256x17xbf16>, vector<128x17xf32> -> vector<128x17xf32>
    %46 = arith.addf %42, %45 : vector<128x17xf32>
    %c1_25 = arith.constant 1 : index
    %c0_26 = arith.constant 0 : index
    %c0_27 = arith.constant 0 : index
    %47 = vector.load %arg7[%c1_25, %c0_26, %c0_27] : memref<2x128x17xf32, #tpu.memory_space<vmem>>, vector<1x128x17xf32>
    %48 = vector.shape_cast %47 : vector<1x128x17xf32> to vector<128x17xf32>
    %49 = vector.shape_cast %46 : vector<128x17xf32> to vector<1x128x17xf32>
    tpu.vector_store %arg7[%c1_25, %c0_26, %c0_27], %49 {strides = array<i32>} : memref<2x128x17xf32, #tpu.memory_space<vmem>>, vector<1x128x17xf32>,
    %c1_i32 = arith.constant 1 : i32
    %50 = arith.cmpi eq, %arg1, %c1_i32 : i32
    %51 = arith.extui %50 : i1 to i32
    %c0_i32_28 = arith.constant 0 : i32
    %52 = arith.cmpi ne, %51, %c0_i32_28 : i32
    scf.if %52 {
      %c0_29 = arith.constant 0 : index
      %c0_30 = arith.constant 0 : index
      %c0_31 = arith.constant 0 : index
      %53 = vector.load %arg7[%c0_29, %c0_30, %c0_31] : memref<2x128x17xf32, #tpu.memory_space<vmem>>, vector<2x128x17xf32>
      %54 = vector.extract_strided_slice %53 {offsets = [0, 0, 16], sizes = [2, 128, 1], strides = [1, 1, 1]} : vector<2x128x17xf32> to vector<2x128x1xf32>
      %55 = tpu.reciprocal %54 {approx = true} : vector<2x128x1xf32> -> vector<2x128x1xf32>
      %56 = vector.extract_strided_slice %53 {offsets = [0, 0, 0], sizes = [2, 128, 16], strides = [1, 1, 1]} : vector<2x128x17xf32> to vector<2x128x16xf32>
      %57 = vector.broadcast %55 : vector<2x128x1xf32> to vector<2x128x16xf32>
      %58 = arith.mulf %56, %57 : vector<2x128x16xf32>
      %c0_32 = arith.constant 0 : index
      %c0_33 = arith.constant 0 : index
      %c0_34 = arith.constant 0 : index
      %59 = vector.load %arg6[%c0_32, %c0_33, %c0_34] : memref<2x128x16xf32, #tpu.memory_space<vmem>>, vector<2x128x16xf32>
      tpu.vector_store %arg6[%c0_32, %c0_33, %c0_34], %58 {strides = array<i32>} : memref<2x128x16xf32, #tpu.memory_space<vmem>>, vector<2x128x16xf32>,
    } else {
    }
    return
  }
  func.func @transform_0(%arg0: i32, %arg1: i32) -> (i32, i32) {
    %c0_i32 = arith.constant 0 : i32
    %c0_i32_0 = arith.constant 0 : i32
    return %arg0, %c0_i32 : i32, i32
  }
  func.func @transform_1(%arg0: i32, %arg1: i32) -> (i32, i32) {
    %c0_i32 = arith.constant 0 : i32
    %c0_i32_0 = arith.constant 0 : i32
    return %c0_i32, %arg1 : i32, i32
  }
  func.func @transform_2(%arg0: i32, %arg1: i32) -> (i32, i32) {
    %c0_i32 = arith.constant 0 : i32
    return %arg0, %arg1 : i32, i32
  }
  func.func @transform_3(%arg0: i32, %arg1: i32) -> (i32, i32, i32) {
    %c0_i32 = arith.constant 0 : i32
    %c0_i32_0 = arith.constant 0 : i32
    %c0_i32_1 = arith.constant 0 : i32
    return %c0_i32, %arg1, %c0_i32_0 : i32, i32, i32
  }
  func.func @transform_4(%arg0: i32, %arg1: i32) -> (i32, i32, i32) {
    %c0_i32 = arith.constant 0 : i32
    %c0_i32_0 = arith.constant 0 : i32
    %c0_i32_1 = arith.constant 0 : i32
    return %c0_i32, %arg0, %c0_i32_0 : i32, i32, i32
  }
}

</mosaic_0001>

<llo_original>
// kernel: tpu_custom_call.1
$region0: #{tpu_custom_call.1}
  #allocation0 [shape = 'u32[]', space=smem, size = 0x4, offset = 0x4, fixed_abs, tag = 'smem constant byte address 0x4 - core index']
  #allocation1 [shape = 'u32[144,128]{1,0:T(1,128)}', space=vmem, size = 0x12000, scoped, tag = 'internal scratch']
  #allocation2 [shape = 'f32[2,128,17]{2,1,0:T(8,128)}', space=vmem, size = 0x20000, scoped, tag = 'scratch operand']
  %s0 = inlined_call_operand.vmem [shape: f32[512,2], index: 0, kind: input, shape index: {}]
  %s1 = inlined_call_operand.vmem [shape: f32[2,512], index: 1, kind: input, shape index: {}]
  %s2 = inlined_call_operand.vmem [shape: s8[512,512], index: 2, kind: input, shape index: {}]
  %s3 = inlined_call_operand.vmem [shape: bf16[2,512,17], index: 3, kind: input, shape index: {}]
  %s4 = inlined_call_operand.vmem [shape: f32[2,512,16], index: 4, kind: output, shape index: {}]
  %s5 = sld [smem:[#allocation0]]
  $region155: #{tpu_custom_call.1} parent=0
    _
  %s7 = ssub.s32 1, %s5
  %s8 = scalar_select 0, %s7, %s5
  $region1: #{tpu_custom_call.1} parent=0
    #allocation3 [shape = 'u8[65536]{0}', space=vmem, size = 0x10000, scoped, tag = 'input window, operand 2']
    #allocation4 [shape = 'u8[262144]{0}', space=vmem, size = 0x40000, scoped, tag = 'input window, operand 3']
    #allocation5 [shape = 'u8[262144]{0}', space=vmem, size = 0x40000, scoped, tag = 'output window, operand 0']
    loop: start=0, step=1, limit=10
    $region2: #{tpu_custom_call.1} parent=1 // loop_pre_header
      _
    $region3: #{tpu_custom_call.1} parent=1 // loop_header
      %s10 = sphi 0, %s14
      %p11 = scmp.ge.s32.totalorder %s10, 10
      %s17 = sphi 0, %s29
      %s18 = sphi 0, %s25
      %s19 = sphi 0, %s17
      %s20 = sphi 0, %s18
      %s21 = sphi 0, %s19
      %s22 = sphi 0, %s20
      %s32 = sphi 0, %s34
      %s35 = sphi 0, %s32
      %s36 = sphi 0, %s35
      %s52 = sphi 0, %s36
      %s58 = sphi 0, %s60
      %s61 = sphi 0, %s58
      %s62 = sphi 0, %s61
      %s78 = sphi 0, %s62
      %s86 = sphi 0, %s88
      %s89 = sphi 0, %s86
      %s90 = sphi 0, %s89
      %s106 = sphi 0, %s90
      %s112 = sphi 0, %s114
      %s115 = sphi 0, %s112
      %s116 = sphi 0, %s115
      %s132 = sphi 0, %s116
      %s138 = sphi 0, %s140
      %s141 = sphi 0, %s138
      %s142 = sphi 0, %s141
      %s158 = sphi 0, %s142
    $region4: #{tpu_custom_call.1} parent=1 // loop_header_branch
      %13 = sbr.rel (%p11) target = $region8
    $region5: #{tpu_custom_call.1} parent=1 // loop_body
      %s15 = ssub.s32 %s10, 1
      %s16 = ssub.s32 %s10, 2
      %s23 = sadd.s32 1, %s18
      %p24 = scmp.ge.s32.totalorder %s23, 2
      %s25 = scalar_select %p24, 0, %s23
      %s26 = sadd.s32 1, %s17
      %s27 = scalar_select %p24, %s26, %s17
      %p28 = scmp.ge.s32.totalorder %s27, 4
      %s29 = scalar_select %p28, 0, %s27
      %s30 = ssub.s32 %s17, %s29
      %p31 = scmp.eq.s32.totalorder %s30, 0
      %s33 = sadd.s32 %s32, 1
      %s34 = scalar_select %p31, %s32, %s33
      %p37 = pneg %p31
      %p38 = scmp.eq.s32.totalorder %s10, 7
      %p39 = por %p37, %p38
      %p40 = scmp.ne.s32.totalorder %s32, %s35
      %p41 = scmp.eq.s32.totalorder %s10, 0
      %p42 = por %p40, %p41
      %p43 = scmp.ne.s32.totalorder %s32, %s35
      %p44 = scmp.eq.s32.totalorder %s15, 7
      %p45 = por %p43, %p44
      %p46 = scmp.ne.s32.totalorder %s35, %s36
      %p47 = scmp.eq.s32.totalorder %s15, 0
      %p48 = por %p46, %p47
      %p49 = scmp.ne.s32.totalorder %s35, %s36
      %p50 = scmp.eq.s32.totalorder %s16, 7
      %p51 = por %p49, %p50
      %p53 = scmp.ne.s32.totalorder %s36, %s52
      %p54 = scmp.eq.s32.totalorder %s16, 0
      %p55 = por %p53, %p54
      %s56 = ssub.s32 %s18, %s25
      %p57 = scmp.eq.s32.totalorder %s56, 0
      %s59 = sadd.s32 %s58, 1
      %s60 = scalar_select %p57, %s58, %s59
      %p63 = pneg %p57
      %p64 = scmp.eq.s32.totalorder %s10, 7
      %p65 = por %p63, %p64
      %p66 = scmp.ne.s32.totalorder %s58, %s61
      %p67 = scmp.eq.s32.totalorder %s10, 0
      %p68 = por %p66, %p67
      %p69 = scmp.ne.s32.totalorder %s58, %s61
      %p70 = scmp.eq.s32.totalorder %s15, 7
      %p71 = por %p69, %p70
      %p72 = scmp.ne.s32.totalorder %s61, %s62
      %p73 = scmp.eq.s32.totalorder %s15, 0
      %p74 = por %p72, %p73
      %p75 = scmp.ne.s32.totalorder %s61, %s62
      %p76 = scmp.eq.s32.totalorder %s16, 7
      %p77 = por %p75, %p76
      %p79 = scmp.ne.s32.totalorder %s62, %s78
      %p80 = scmp.eq.s32.totalorder %s16, 0
      %p81 = por %p79, %p80
      %s82 = ssub.s32 %s17, %s29
      %s83 = ssub.s32 %s18, %s25
      %s84 = sor.u32 %s82, %s83
      %p85 = scmp.eq.s32.totalorder %s84, 0
      %s87 = sadd.s32 %s86, 1
      %s88 = scalar_select %p85, %s86, %s87
      %p91 = pneg %p85
      %p92 = scmp.eq.s32.totalorder %s10, 7
      %p93 = por %p91, %p92
      %p94 = scmp.ne.s32.totalorder %s86, %s89
      %p95 = scmp.eq.s32.totalorder %s10, 0
      %p96 = por %p94, %p95
      %p97 = scmp.ne.s32.totalorder %s86, %s89
      %p98 = scmp.eq.s32.totalorder %s15, 7
      %p99 = por %p97, %p98
      %p100 = scmp.ne.s32.totalorder %s89, %s90
      %p101 = scmp.eq.s32.totalorder %s15, 0
      %p102 = por %p100, %p101
      %p103 = scmp.ne.s32.totalorder %s89, %s90
      %p104 = scmp.eq.s32.totalorder %s16, 7
      %p105 = por %p103, %p104
      %p107 = scmp.ne.s32.totalorder %s90, %s106
      %p108 = scmp.eq.s32.totalorder %s16, 0
      %p109 = por %p107, %p108
      %s110 = ssub.s32 %s18, %s25
      %p111 = scmp.eq.s32.totalorder %s110, 0
      %s113 = sadd.s32 %s112, 1
      %s114 = scalar_select %p111, %s112, %s113
      %p117 = pneg %p111
      %p118 = scmp.eq.s32.totalorder %s10, 7
      %p119 = por %p117, %p118
      %p120 = scmp.ne.s32.totalorder %s112, %s115
      %p121 = scmp.eq.s32.totalorder %s10, 0
      %p122 = por %p120, %p121
      %p123 = scmp.ne.s32.totalorder %s112, %s115
      %p124 = scmp.eq.s32.totalorder %s15, 7
      %p125 = por %p123, %p124
      %p126 = scmp.ne.s32.totalorder %s115, %s116
      %p127 = scmp.eq.s32.totalorder %s15, 0
      %p128 = por %p126, %p127
      %p129 = scmp.ne.s32.totalorder %s115, %s116
      %p130 = scmp.eq.s32.totalorder %s16, 7
      %p131 = por %p129, %p130
      %p133 = scmp.ne.s32.totalorder %s116, %s132
      %p134 = scmp.eq.s32.totalorder %s16, 0
      %p135 = por %p133, %p134
      %s136 = ssub.s32 %s17, %s29
      %p137 = scmp.eq.s32.totalorder %s136, 0
      %s139 = sadd.s32 %s138, 1
      %s140 = scalar_select %p137, %s138, %s139
      %p143 = pneg %p137
      %p144 = scmp.eq.s32.totalorder %s10, 7
      %p145 = por %p143, %p144
      %p146 = scmp.ne.s32.totalorder %s138, %s141
      %p147 = scmp.eq.s32.totalorder %s10, 0
      %p148 = por %p146, %p147
      %p149 = scmp.ne.s32.totalorder %s138, %s141
      %p150 = scmp.eq.s32.totalorder %s15, 7
      %p151 = por %p149, %p150
      %p152 = scmp.ne.s32.totalorder %s141, %s142
      %p153 = scmp.eq.s32.totalorder %s15, 0
      %p154 = por %p152, %p153
      %p155 = scmp.ne.s32.totalorder %s141, %s142
      %p156 = scmp.eq.s32.totalorder %s16, 7
      %p157 = por %p155, %p156
      %p159 = scmp.ne.s32.totalorder %s142, %s158
      %p160 = scmp.eq.s32.totalorder %s16, 0
      %p161 = por %p159, %p160
      %p162 = scmp.le.s32.totalorder 1, %s10
      %p163 = scmp.lt.s32.totalorder %s10, 9
      %p164 = pnand %p162, %p163
      %p165 = pneg %p164
      // Predicated region
      $region9: #{tpu_custom_call.1} parent=5 // pred_check
        _
      $region10: #{tpu_custom_call.1} parent=5 // pred_check_branch
        %167 = sbr.rel (%p164) target = $region12
      $region11: #{tpu_custom_call.1} parent=5 // pred_region
        %s168 = ssub.s32 %s10, 1
      $region12: #{tpu_custom_call.1} parent=5 // pred_fallthru
        _
      %p169 = scmp.lt.s32.totalorder %s10, 8
      // Predicated region
      $region13: #{tpu_custom_call.1} parent=5 // pred_check
        %p170 = pneg %p169
      $region14: #{tpu_custom_call.1} parent=5 // pred_check_branch
        %172 = sbr.rel (%p170) target = $region16
      $region15: #{tpu_custom_call.1} parent=5 // pred_region
        // Predicated region
        $region17: #{tpu_custom_call.1} parent=15 // pred_check
          %p173 = pneg %p42
        $region18: #{tpu_custom_call.1} parent=15 // pred_check_branch
          %175 = sbr.rel (%p173) target = $region20
        $region19: #{tpu_custom_call.1} parent=15 // pred_region
          %s176 = smul.u32 16, %s17
          %p177 = scmp.lt.s32.totalorder %s176, 63
          %s178 = scalar_select %p177, %s176, 63
          %s179 = smul.addr %s178, 8
          %s180 = scalar_lea.vmem %s0, %s179
          %s181 = smul.u32 16, %s17
        $region20: #{tpu_custom_call.1} parent=15 // pred_fallthru
          _
        // Predicated region
        $region21: #{tpu_custom_call.1} parent=15 // pred_check
          %p182 = pneg %p68
        $region22: #{tpu_custom_call.1} parent=15 // pred_check_branch
          %184 = sbr.rel (%p182) target = $region24
        $region23: #{tpu_custom_call.1} parent=15 // pred_region
          %s185 = smul.u32 2, %s18
          %p186 = scmp.lt.s32.totalorder %s185, 3
          %s187 = scalar_select %p186, %s185, 3
          %s188 = smul.addr %s187, 2
          %s189 = scalar_lea.vmem %s1, %s188
          %s190 = smul.u32 2, %s18
        $region24: #{tpu_custom_call.1} parent=15 // pred_fallthru
          _
        // Predicated region
        $region25: #{tpu_custom_call.1} parent=15 // pred_check
          %p191 = pneg %p96
        $region26: #{tpu_custom_call.1} parent=15 // pred_check_branch
          %193 = sbr.rel (%p191) target = $region28
        $region27: #{tpu_custom_call.1} parent=15 // pred_region
          %s194 = sand.u32 %s86, 1
          %s195 = sand.u32 %s86, 1
          %s196 = smul.addr %s195, 64
          %s197 = scalar_lea.vmem [#allocation3], %s196
          %s198 = smul.u32 4, %s17
          %s199 = smul.u32 2, %s18
          %s200 = smul.addr %s198, 4
          %s201 = sadd.s32 %s199, %s200
          %s202 = smul.addr %s201, 8
          %s203 = scalar_lea.vmem %s2, %s202
          // Predicated region
          $region29: #{tpu_custom_call.1} parent=27 // pred_check
            _
          $region30: #{tpu_custom_call.1} parent=27 // pred_check_branch
            %205 = sbr.rel (0) target = $region32
          $region31: #{tpu_custom_call.1} parent=27 // pred_region
            // Predicated region
            $region33: #{tpu_custom_call.1} parent=31 // pred_check
              _
            $region34: #{tpu_custom_call.1} parent=31 // pred_check_branch
              %207 = sbr.rel (0) target = $region36
            $region35: #{tpu_custom_call.1} parent=31 // pred_region
              loop: start=0, step=1, limit=1
              $region37: #{tpu_custom_call.1} parent=35 // loop_pre_header
                _
              $region38: #{tpu_custom_call.1} parent=35 // loop_header
                %s209 = sphi 0, %s213
                %p210 = scmp.ge.s32.totalorder %s209, 1
                %s214 = sphi %s203, %s203
                %s215 = sphi %s197, %s197
              $region39: #{tpu_custom_call.1} parent=35 // loop_header_branch
                %212 = sbr.rel (%p210) target = $region43
              $region40: #{tpu_custom_call.1} parent=35 // loop_body
                %v216 = vld [vmem:[%s214] sm:$0xff]
                %217 = vst [vmem:[%s215] sm:$0xff] %v216
                %v218 = vld [vmem:[%s214 + $0x8] sm:$0xff]
                %219 = vst [vmem:[%s215 + $0x8] sm:$0xff] %v218
                %v220 = vld [vmem:[%s214 + $0x20] sm:$0xff]
                %221 = vst [vmem:[%s215 + $0x10] sm:$0xff] %v220
                %v222 = vld [vmem:[%s214 + $0x28] sm:$0xff]
                %223 = vst [vmem:[%s215 + $0x18] sm:$0xff] %v222
                %v224 = vld [vmem:[%s214 + $0x40] sm:$0xff]
                %225 = vst [vmem:[%s215 + $0x20] sm:$0xff] %v224
                %v226 = vld [vmem:[%s214 + $0x48] sm:$0xff]
                %227 = vst [vmem:[%s215 + $0x28] sm:$0xff] %v226
                %v228 = vld [vmem:[%s214 + $0x60] sm:$0xff]
                %229 = vst [vmem:[%s215 + $0x30] sm:$0xff] %v228
                %v230 = vld [vmem:[%s214 + $0x68] sm:$0xff]
                %231 = vst [vmem:[%s215 + $0x38] sm:$0xff] %v230
              $region41: #{tpu_custom_call.1} parent=35 // loop_footer
                %s213 = sadd.s32 1, %s209
              $region42: #{tpu_custom_call.1} parent=35 // loop_footer_branch
                %208 = sbr.rel target = $region38
              $region43: #{tpu_custom_call.1} parent=35 // loop_exit
                _
            $region36: #{tpu_custom_call.1} parent=31 // pred_fallthru
              _
            // Predicated region
            $region44: #{tpu_custom_call.1} parent=31 // pred_check
              _
            $region45: #{tpu_custom_call.1} parent=31 // pred_check_branch
              %233 = sbr.rel target = $region47
            $region46: #{tpu_custom_call.1} parent=31 // pred_region
              _
            $region47: #{tpu_custom_call.1} parent=31 // pred_fallthru
              _
          $region32: #{tpu_custom_call.1} parent=27 // pred_fallthru
            _
          %234 = vnop
        $region28: #{tpu_custom_call.1} parent=15 // pred_fallthru
          _
        // Predicated region
        $region48: #{tpu_custom_call.1} parent=15 // pred_check
          %p235 = pneg %p122
        $region49: #{tpu_custom_call.1} parent=15 // pred_check_branch
          %237 = sbr.rel (%p235) target = $region51
        $region50: #{tpu_custom_call.1} parent=15 // pred_region
          %s238 = sand.u32 %s112, 1
          %s239 = sand.u32 %s112, 1
          %s240 = smul.addr %s239, 256
          %s241 = scalar_lea.vmem [#allocation4], %s240
          %s242 = smul.u32 32, %s18
          %s243 = smul.addr %s242, 4
          %s244 = scalar_lea.vmem %s3, %s243
          // Predicated region
          $region52: #{tpu_custom_call.1} parent=50 // pred_check
            _
          $region53: #{tpu_custom_call.1} parent=50 // pred_check_branch
            %246 = sbr.rel (0) target = $region55
          $region54: #{tpu_custom_call.1} parent=50 // pred_region
            // Predicated region
            $region56: #{tpu_custom_call.1} parent=54 // pred_check
              _
            $region57: #{tpu_custom_call.1} parent=54 // pred_check_branch
              %248 = sbr.rel target = $region59
            $region58: #{tpu_custom_call.1} parent=54 // pred_region
              // Predicated region
              $region71: #{tpu_custom_call.1} parent=58 // pred_check
                _
              $region72: #{tpu_custom_call.1} parent=58 // pred_check_branch
                %389 = sbr.rel (0) target = $region74
              $region73: #{tpu_custom_call.1} parent=58 // pred_region
                loop: start=0, step=1, limit=1
                $region75: #{tpu_custom_call.1} parent=73 // loop_pre_header
                  _
                $region76: #{tpu_custom_call.1} parent=73 // loop_header
                  %s391 = sphi 0, %s395
                  %p392 = scmp.ge.s32.totalorder %s391, 1
                  %s396 = sphi %s244, %s244
                  %s397 = sphi %s241, %s241
                $region77: #{tpu_custom_call.1} parent=73 // loop_header_branch
                  %394 = sbr.rel (%p392) target = $region81
                $region78: #{tpu_custom_call.1} parent=73 // loop_body
                  _
                $region79: #{tpu_custom_call.1} parent=73 // loop_footer
                  %s395 = sadd.s32 1, %s391
                $region80: #{tpu_custom_call.1} parent=73 // loop_footer_branch
                  %390 = sbr.rel target = $region76
                $region81: #{tpu_custom_call.1} parent=73 // loop_exit
                  _
                loop: start=0, step=1, limit=1
                $region82: #{tpu_custom_call.1} parent=73 // loop_pre_header
                  _
                $region83: #{tpu_custom_call.1} parent=73 // loop_header
                  %s400 = sphi 0, %s404
                  %p401 = scmp.ge.s32.totalorder %s400, 1
                  %s405 = sphi %s244, %s244
                  %s406 = sphi %s241, %s241
                $region84: #{tpu_custom_call.1} parent=73 // loop_header_branch
                  %403 = sbr.rel (%p401) target = $region88
                $region85: #{tpu_custom_call.1} parent=73 // loop_body
                  %v407 = vld [vmem:[%s405] sm:$0xf]
                  %408 = vst [vmem:[%s406] sm:$0xf] %v407
                  %v409 = vld [vmem:[%s405 + $0x4] sm:$0xf]
                  %410 = vst [vmem:[%s406 + $0x4] sm:$0xf] %v409
                  %v411 = vld [vmem:[%s405 + $0x8] sm:$0xf]
                  %412 = vst [vmem:[%s406 + $0x8] sm:$0xf] %v411
                  %v413 = vld [vmem:[%s405 + $0xc] sm:$0xf]
                  %414 = vst [vmem:[%s406 + $0xc] sm:$0xf] %v413
                  %v415 = vld [vmem:[%s405 + $0x10] sm:$0xf]
                  %416 = vst [vmem:[%s406 + $0x10] sm:$0xf] %v415
                  %v417 = vld [vmem:[%s405 + $0x14] sm:$0xf]
                  %418 = vst [vmem:[%s406 + $0x14] sm:$0xf] %v417
                  %v419 = vld [vmem:[%s405 + $0x18] sm:$0xf]
                  %420 = vst [vmem:[%s406 + $0x18] sm:$0xf] %v419
                  %v421 = vld [vmem:[%s405 + $0x1c] sm:$0xf]
                  %422 = vst [vmem:[%s406 + $0x1c] sm:$0xf] %v421
                  %v423 = vld [vmem:[%s405 + $0x20] sm:$0xf]
                  %424 = vst [vmem:[%s406 + $0x20] sm:$0xf] %v423
                  %v425 = vld [vmem:[%s405 + $0x24] sm:$0xf]
                  %426 = vst [vmem:[%s406 + $0x24] sm:$0xf] %v425
                  %v427 = vld [vmem:[%s405 + $0x28] sm:$0xf]
                  %428 = vst [vmem:[%s406 + $0x28] sm:$0xf] %v427
                  %v429 = vld [vmem:[%s405 + $0x2c] sm:$0xf]
                  %430 = vst [vmem:[%s406 + $0x2c] sm:$0xf] %v429
                  %v431 = vld [vmem:[%s405 + $0x30] sm:$0xf]
                  %432 = vst [vmem:[%s406 + $0x30] sm:$0xf] %v431
                  %v433 = vld [vmem:[%s405 + $0x34] sm:$0xf]
                  %434 = vst [vmem:[%s406 + $0x34] sm:$0xf] %v433
                  %v435 = vld [vmem:[%s405 + $0x38] sm:$0xf]
                  %436 = vst [vmem:[%s406 + $0x38] sm:$0xf] %v435
                  %v437 = vld [vmem:[%s405 + $0x3c] sm:$0xf]
                  %438 = vst [vmem:[%s406 + $0x3c] sm:$0xf] %v437
                  %v439 = vld [vmem:[%s405 + $0x40] sm:$0xf]
                  %440 = vst [vmem:[%s406 + $0x40] sm:$0xf] %v439
                  %v441 = vld [vmem:[%s405 + $0x44] sm:$0xf]
                  %442 = vst [vmem:[%s406 + $0x44] sm:$0xf] %v441
                  %v443 = vld [vmem:[%s405 + $0x48] sm:$0xf]
                  %444 = vst [vmem:[%s406 + $0x48] sm:$0xf] %v443
                  %v445 = vld [vmem:[%s405 + $0x4c] sm:$0xf]
                  %446 = vst [vmem:[%s406 + $0x4c] sm:$0xf] %v445
                  %v447 = vld [vmem:[%s405 + $0x50] sm:$0xf]
                  %448 = vst [vmem:[%s406 + $0x50] sm:$0xf] %v447
                  %v449 = vld [vmem:[%s405 + $0x54] sm:$0xf]
                  %450 = vst [vmem:[%s406 + $0x54] sm:$0xf] %v449
                  %v451 = vld [vmem:[%s405 + $0x58] sm:$0xf]
                  %452 = vst [vmem:[%s406 + $0x58] sm:$0xf] %v451
                  %v453 = vld [vmem:[%s405 + $0x5c] sm:$0xf]
                  %454 = vst [vmem:[%s406 + $0x5c] sm:$0xf] %v453
                  %v455 = vld [vmem:[%s405 + $0x60] sm:$0xf]
                  %456 = vst [vmem:[%s406 + $0x60] sm:$0xf] %v455
                  %v457 = vld [vmem:[%s405 + $0x64] sm:$0xf]
                  %458 = vst [vmem:[%s406 + $0x64] sm:$0xf] %v457
                  %v459 = vld [vmem:[%s405 + $0x68] sm:$0xf]
                  %460 = vst [vmem:[%s406 + $0x68] sm:$0xf] %v459
                  %v461 = vld [vmem:[%s405 + $0x6c] sm:$0xf]
                  %462 = vst [vmem:[%s406 + $0x6c] sm:$0xf] %v461
                  %v463 = vld [vmem:[%s405 + $0x70] sm:$0xf]
                  %464 = vst [vmem:[%s406 + $0x70] sm:$0xf] %v463
                  %v465 = vld [vmem:[%s405 + $0x74] sm:$0xf]
                  %466 = vst [vmem:[%s406 + $0x74] sm:$0xf] %v465
                  %v467 = vld [vmem:[%s405 + $0x78] sm:$0xf]
                  %468 = vst [vmem:[%s406 + $0x78] sm:$0xf] %v467
                  %v469 = vld [vmem:[%s405 + $0x7c] sm:$0xf]
                  %470 = vst [vmem:[%s406 + $0x7c] sm:$0xf] %v469
                  %v471 = vld [vmem:[%s405 + $0x100] sm:$0xf]
                  %472 = vst [vmem:[%s406 + $0x80] sm:$0xf] %v471
                  %v473 = vld [vmem:[%s405 + $0x104] sm:$0xf]
                  %474 = vst [vmem:[%s406 + $0x84] sm:$0xf] %v473
                  %v475 = vld [vmem:[%s405 + $0x108] sm:$0xf]
                  %476 = vst [vmem:[%s406 + $0x88] sm:$0xf] %v475
                  %v477 = vld [vmem:[%s405 + $0x10c] sm:$0xf]
                  %478 = vst [vmem:[%s406 + $0x8c] sm:$0xf] %v477
                  %v479 = vld [vmem:[%s405 + $0x110] sm:$0xf]
                  %480 = vst [vmem:[%s406 + $0x90] sm:$0xf] %v479
                  %v481 = vld [vmem:[%s405 + $0x114] sm:$0xf]
                  %482 = vst [vmem:[%s406 + $0x94] sm:$0xf] %v481
                  %v483 = vld [vmem:[%s405 + $0x118] sm:$0xf]
                  %484 = vst [vmem:[%s406 + $0x98] sm:$0xf] %v483
                  %v485 = vld [vmem:[%s405 + $0x11c] sm:$0xf]
                  %486 = vst [vmem:[%s406 + $0x9c] sm:$0xf] %v485
                  %v487 = vld [vmem:[%s405 + $0x120] sm:$0xf]
                  %488 = vst [vmem:[%s406 + $0xa0] sm:$0xf] %v487
                  %v489 = vld [vmem:[%s405 + $0x124] sm:$0xf]
                  %490 = vst [vmem:[%s406 + $0xa4] sm:$0xf] %v489
                  %v491 = vld [vmem:[%s405 + $0x128] sm:$0xf]
                  %492 = vst [vmem:[%s406 + $0xa8] sm:$0xf] %v491
                  %v493 = vld [vmem:[%s405 + $0x12c] sm:$0xf]
                  %494 = vst [vmem:[%s406 + $0xac] sm:$0xf] %v493
                  %v495 = vld [vmem:[%s405 + $0x130] sm:$0xf]
                  %496 = vst [vmem:[%s406 + $0xb0] sm:$0xf] %v495
                  %v497 = vld [vmem:[%s405 + $0x134] sm:$0xf]
                  %498 = vst [vmem:[%s406 + $0xb4] sm:$0xf] %v497
                  %v499 = vld [vmem:[%s405 + $0x138] sm:$0xf]
                  %500 = vst [vmem:[%s406 + $0xb8] sm:$0xf] %v499
                  %v501 = vld [vmem:[%s405 + $0x13c] sm:$0xf]
                  %502 = vst [vmem:[%s406 + $0xbc] sm:$0xf] %v501
                  %v503 = vld [vmem:[%s405 + $0x140] sm:$0xf]
                  %504 = vst [vmem:[%s406 + $0xc0] sm:$0xf] %v503
                  %v505 = vld [vmem:[%s405 + $0x144] sm:$0xf]
                  %506 = vst [vmem:[%s406 + $0xc4] sm:$0xf] %v505
                  %v507 = vld [vmem:[%s405 + $0x148] sm:$0xf]
                  %508 = vst [vmem:[%s406 + $0xc8] sm:$0xf] %v507
                  %v509 = vld [vmem:[%s405 + $0x14c] sm:$0xf]
                  %510 = vst [vmem:[%s406 + $0xcc] sm:$0xf] %v509
                  %v511 = vld [vmem:[%s405 + $0x150] sm:$0xf]
                  %512 = vst [vmem:[%s406 + $0xd0] sm:$0xf] %v511
                  %v513 = vld [vmem:[%s405 + $0x154] sm:$0xf]
                  %514 = vst [vmem:[%s406 + $0xd4] sm:$0xf] %v513
                  %v515 = vld [vmem:[%s405 + $0x158] sm:$0xf]
                  %516 = vst [vmem:[%s406 + $0xd8] sm:$0xf] %v515
                  %v517 = vld [vmem:[%s405 + $0x15c] sm:$0xf]
                  %518 = vst [vmem:[%s406 + $0xdc] sm:$0xf] %v517
                  %v519 = vld [vmem:[%s405 + $0x160] sm:$0xf]
                  %520 = vst [vmem:[%s406 + $0xe0] sm:$0xf] %v519
                  %v521 = vld [vmem:[%s405 + $0x164] sm:$0xf]
                  %522 = vst [vmem:[%s406 + $0xe4] sm:$0xf] %v521
                  %v523 = vld [vmem:[%s405 + $0x168] sm:$0xf]
                  %524 = vst [vmem:[%s406 + $0xe8] sm:$0xf] %v523
                  %v525 = vld [vmem:[%s405 + $0x16c] sm:$0xf]
                  %526 = vst [vmem:[%s406 + $0xec] sm:$0xf] %v525
                  %v527 = vld [vmem:[%s405 + $0x170] sm:$0xf]
                  %528 = vst [vmem:[%s406 + $0xf0] sm:$0xf] %v527
                  %v529 = vld [vmem:[%s405 + $0x174] sm:$0xf]
                  %530 = vst [vmem:[%s406 + $0xf4] sm:$0xf] %v529
                  %v531 = vld [vmem:[%s405 + $0x178] sm:$0xf]
                  %532 = vst [vmem:[%s406 + $0xf8] sm:$0xf] %v531
                  %v533 = vld [vmem:[%s405 + $0x17c] sm:$0xf]
                  %534 = vst [vmem:[%s406 + $0xfc] sm:$0xf] %v533
                $region86: #{tpu_custom_call.1} parent=73 // loop_footer
                  %s404 = sadd.s32 1, %s400
                $region87: #{tpu_custom_call.1} parent=73 // loop_footer_branch
                  %399 = sbr.rel target = $region83
                $region88: #{tpu_custom_call.1} parent=73 // loop_exit
                  _
              $region74: #{tpu_custom_call.1} parent=58 // pred_fallthru
                _
            $region59: #{tpu_custom_call.1} parent=54 // pred_fallthru
              _
            // Predicated region
            $region60: #{tpu_custom_call.1} parent=54 // pred_check
              _
            $region61: #{tpu_custom_call.1} parent=54 // pred_check_branch
              %250 = sbr.rel (0) target = $region63
            $region62: #{tpu_custom_call.1} parent=54 // pred_region
              loop: start=0, step=1, limit=1
              $region64: #{tpu_custom_call.1} parent=62 // loop_pre_header
                _
              $region65: #{tpu_custom_call.1} parent=62 // loop_header
                %s253 = sphi 0, %s257
                %p254 = scmp.ge.s32.totalorder %s253, 1
                %s258 = sphi %s244, %s244
                %s259 = sphi %s241, %s241
              $region66: #{tpu_custom_call.1} parent=62 // loop_header_branch
                %256 = sbr.rel (%p254) target = $region70
              $region67: #{tpu_custom_call.1} parent=62 // loop_body
                %v260 = vld [vmem:[%s258] sm:$0xf]
                %261 = vst [vmem:[%s259] sm:$0xf] %v260
                %v262 = vld [vmem:[%s258 + $0x4] sm:$0xf]
                %263 = vst [vmem:[%s259 + $0x4] sm:$0xf] %v262
                %v264 = vld [vmem:[%s258 + $0x8] sm:$0xf]
                %265 = vst [vmem:[%s259 + $0x8] sm:$0xf] %v264
                %v266 = vld [vmem:[%s258 + $0xc] sm:$0xf]
                %267 = vst [vmem:[%s259 + $0xc] sm:$0xf] %v266
                %v268 = vld [vmem:[%s258 + $0x10] sm:$0xf]
                %269 = vst [vmem:[%s259 + $0x10] sm:$0xf] %v268
                %v270 = vld [vmem:[%s258 + $0x14] sm:$0xf]
                %271 = vst [vmem:[%s259 + $0x14] sm:$0xf] %v270
                %v272 = vld [vmem:[%s258 + $0x18] sm:$0xf]
                %273 = vst [vmem:[%s259 + $0x18] sm:$0xf] %v272
                %v274 = vld [vmem:[%s258 + $0x1c] sm:$0xf]
                %275 = vst [vmem:[%s259 + $0x1c] sm:$0xf] %v274
                %v276 = vld [vmem:[%s258 + $0x20] sm:$0xf]
                %277 = vst [vmem:[%s259 + $0x20] sm:$0xf] %v276
                %v278 = vld [vmem:[%s258 + $0x24] sm:$0xf]
                %279 = vst [vmem:[%s259 + $0x24] sm:$0xf] %v278
                %v280 = vld [vmem:[%s258 + $0x28] sm:$0xf]
                %281 = vst [vmem:[%s259 + $0x28] sm:$0xf] %v280
                %v282 = vld [vmem:[%s258 + $0x2c] sm:$0xf]
                %283 = vst [vmem:[%s259 + $0x2c] sm:$0xf] %v282
                %v284 = vld [vmem:[%s258 + $0x30] sm:$0xf]
                %285 = vst [vmem:[%s259 + $0x30] sm:$0xf] %v284
                %v286 = vld [vmem:[%s258 + $0x34] sm:$0xf]
                %287 = vst [vmem:[%s259 + $0x34] sm:$0xf] %v286
                %v288 = vld [vmem:[%s258 + $0x38] sm:$0xf]
                %289 = vst [vmem:[%s259 + $0x38] sm:$0xf] %v288
                %v290 = vld [vmem:[%s258 + $0x3c] sm:$0xf]
                %291 = vst [vmem:[%s259 + $0x3c] sm:$0xf] %v290
                %v292 = vld [vmem:[%s258 + $0x40] sm:$0xf]
                %293 = vst [vmem:[%s259 + $0x40] sm:$0xf] %v292
                %v294 = vld [vmem:[%s258 + $0x44] sm:$0xf]
                %295 = vst [vmem:[%s259 + $0x44] sm:$0xf] %v294
                %v296 = vld [vmem:[%s258 + $0x48] sm:$0xf]
                %297 = vst [vmem:[%s259 + $0x48] sm:$0xf] %v296
                %v298 = vld [vmem:[%s258 + $0x4c] sm:$0xf]
                %299 = vst [vmem:[%s259 + $0x4c] sm:$0xf] %v298
                %v300 = vld [vmem:[%s258 + $0x50] sm:$0xf]
                %301 = vst [vmem:[%s259 + $0x50] sm:$0xf] %v300
                %v302 = vld [vmem:[%s258 + $0x54] sm:$0xf]
                %303 = vst [vmem:[%s259 + $0x54] sm:$0xf] %v302
                %v304 = vld [vmem:[%s258 + $0x58] sm:$0xf]
                %305 = vst [vmem:[%s259 + $0x58] sm:$0xf] %v304
                %v306 = vld [vmem:[%s258 + $0x5c] sm:$0xf]
                %307 = vst [vmem:[%s259 + $0x5c] sm:$0xf] %v306
                %v308 = vld [vmem:[%s258 + $0x60] sm:$0xf]
                %309 = vst [vmem:[%s259 + $0x60] sm:$0xf] %v308
                %v310 = vld [vmem:[%s258 + $0x64] sm:$0xf]
                %311 = vst [vmem:[%s259 + $0x64] sm:$0xf] %v310
                %v312 = vld [vmem:[%s258 + $0x68] sm:$0xf]
                %313 = vst [vmem:[%s259 + $0x68] sm:$0xf] %v312
                %v314 = vld [vmem:[%s258 + $0x6c] sm:$0xf]
                %315 = vst [vmem:[%s259 + $0x6c] sm:$0xf] %v314
                %v316 = vld [vmem:[%s258 + $0x70] sm:$0xf]
                %317 = vst [vmem:[%s259 + $0x70] sm:$0xf] %v316
                %v318 = vld [vmem:[%s258 + $0x74] sm:$0xf]
                %319 = vst [vmem:[%s259 + $0x74] sm:$0xf] %v318
                %v320 = vld [vmem:[%s258 + $0x78] sm:$0xf]
                %321 = vst [vmem:[%s259 + $0x78] sm:$0xf] %v320
                %v322 = vld [vmem:[%s258 + $0x7c] sm:$0xf]
                %323 = vst [vmem:[%s259 + $0x7c] sm:$0xf] %v322
                %v324 = vld [vmem:[%s258 + $0x100] sm:$0xf]
                %325 = vst [vmem:[%s259 + $0x80] sm:$0xf] %v324
                %v326 = vld [vmem:[%s258 + $0x104] sm:$0xf]
                %327 = vst [vmem:[%s259 + $0x84] sm:$0xf] %v326
                %v328 = vld [vmem:[%s258 + $0x108] sm:$0xf]
                %329 = vst [vmem:[%s259 + $0x88] sm:$0xf] %v328
                %v330 = vld [vmem:[%s258 + $0x10c] sm:$0xf]
                %331 = vst [vmem:[%s259 + $0x8c] sm:$0xf] %v330
                %v332 = vld [vmem:[%s258 + $0x110] sm:$0xf]
                %333 = vst [vmem:[%s259 + $0x90] sm:$0xf] %v332
                %v334 = vld [vmem:[%s258 + $0x114] sm:$0xf]
                %335 = vst [vmem:[%s259 + $0x94] sm:$0xf] %v334
                %v336 = vld [vmem:[%s258 + $0x118] sm:$0xf]
                %337 = vst [vmem:[%s259 + $0x98] sm:$0xf] %v336
                %v338 = vld [vmem:[%s258 + $0x11c] sm:$0xf]
                %339 = vst [vmem:[%s259 + $0x9c] sm:$0xf] %v338
                %v340 = vld [vmem:[%s258 + $0x120] sm:$0xf]
                %341 = vst [vmem:[%s259 + $0xa0] sm:$0xf] %v340
                %v342 = vld [vmem:[%s258 + $0x124] sm:$0xf]
                %343 = vst [vmem:[%s259 + $0xa4] sm:$0xf] %v342
                %v344 = vld [vmem:[%s258 + $0x128] sm:$0xf]
                %345 = vst [vmem:[%s259 + $0xa8] sm:$0xf] %v344
                %v346 = vld [vmem:[%s258 + $0x12c] sm:$0xf]
                %347 = vst [vmem:[%s259 + $0xac] sm:$0xf] %v346
                %v348 = vld [vmem:[%s258 + $0x130] sm:$0xf]
                %349 = vst [vmem:[%s259 + $0xb0] sm:$0xf] %v348
                %v350 = vld [vmem:[%s258 + $0x134] sm:$0xf]
                %351 = vst [vmem:[%s259 + $0xb4] sm:$0xf] %v350
                %v352 = vld [vmem:[%s258 + $0x138] sm:$0xf]
                %353 = vst [vmem:[%s259 + $0xb8] sm:$0xf] %v352
                %v354 = vld [vmem:[%s258 + $0x13c] sm:$0xf]
                %355 = vst [vmem:[%s259 + $0xbc] sm:$0xf] %v354
                %v356 = vld [vmem:[%s258 + $0x140] sm:$0xf]
                %357 = vst [vmem:[%s259 + $0xc0] sm:$0xf] %v356
                %v358 = vld [vmem:[%s258 + $0x144] sm:$0xf]
                %359 = vst [vmem:[%s259 + $0xc4] sm:$0xf] %v358
                %v360 = vld [vmem:[%s258 + $0x148] sm:$0xf]
                %361 = vst [vmem:[%s259 + $0xc8] sm:$0xf] %v360
                %v362 = vld [vmem:[%s258 + $0x14c] sm:$0xf]
                %363 = vst [vmem:[%s259 + $0xcc] sm:$0xf] %v362
                %v364 = vld [vmem:[%s258 + $0x150] sm:$0xf]
                %365 = vst [vmem:[%s259 + $0xd0] sm:$0xf] %v364
                %v366 = vld [vmem:[%s258 + $0x154] sm:$0xf]
                %367 = vst [vmem:[%s259 + $0xd4] sm:$0xf] %v366
                %v368 = vld [vmem:[%s258 + $0x158] sm:$0xf]
                %369 = vst [vmem:[%s259 + $0xd8] sm:$0xf] %v368
                %v370 = vld [vmem:[%s258 + $0x15c] sm:$0xf]
                %371 = vst [vmem:[%s259 + $0xdc] sm:$0xf] %v370
                %v372 = vld [vmem:[%s258 + $0x160] sm:$0xf]
                %373 = vst [vmem:[%s259 + $0xe0] sm:$0xf] %v372
                %v374 = vld [vmem:[%s258 + $0x164] sm:$0xf]
                %375 = vst [vmem:[%s259 + $0xe4] sm:$0xf] %v374
                %v376 = vld [vmem:[%s258 + $0x168] sm:$0xf]
                %377 = vst [vmem:[%s259 + $0xe8] sm:$0xf] %v376
                %v378 = vld [vmem:[%s258 + $0x16c] sm:$0xf]
                %379 = vst [vmem:[%s259 + $0xec] sm:$0xf] %v378
                %v380 = vld [vmem:[%s258 + $0x170] sm:$0xf]
                %381 = vst [vmem:[%s259 + $0xf0] sm:$0xf] %v380
                %v382 = vld [vmem:[%s258 + $0x174] sm:$0xf]
                %383 = vst [vmem:[%s259 + $0xf4] sm:$0xf] %v382
                %v384 = vld [vmem:[%s258 + $0x178] sm:$0xf]
                %385 = vst [vmem:[%s259 + $0xf8] sm:$0xf] %v384
                %v386 = vld [vmem:[%s258 + $0x17c] sm:$0xf]
                %387 = vst [vmem:[%s259 + $0xfc] sm:$0xf] %v386
              $region68: #{tpu_custom_call.1} parent=62 // loop_footer
                %s257 = sadd.s32 1, %s253
              $region69: #{tpu_custom_call.1} parent=62 // loop_footer_branch
                %252 = sbr.rel target = $region65
              $region70: #{tpu_custom_call.1} parent=62 // loop_exit
                _
            $region63: #{tpu_custom_call.1} parent=54 // pred_fallthru
              _
          $region55: #{tpu_custom_call.1} parent=50 // pred_fallthru
            _
          %535 = vnop
        $region51: #{tpu_custom_call.1} parent=15 // pred_fallthru
          _
      $region16: #{tpu_custom_call.1} parent=5 // pred_fallthru
        _
      %p536 = scmp.le.s32.totalorder 1, %s10
      %p537 = scmp.lt.s32.totalorder %s10, 9
      %p538 = pnand %p536, %p537
      %p539 = pneg %p538
      // Predicated region
      $region89: #{tpu_custom_call.1} parent=5 // pred_check
        _
      $region90: #{tpu_custom_call.1} parent=5 // pred_check_branch
        %541 = sbr.rel (%p538) target = $region92
      $region91: #{tpu_custom_call.1} parent=5 // pred_region
        %s542 = ssub.s32 %s10, 1
        %s543 = sand.u32 %s89, 1
        %s544 = sand.u32 %s89, 1
        %s545 = smul.addr %s544, 64
        %s546 = scalar_lea.vmem [#allocation3], %s545
        // Predicated region
        $region93: #{tpu_custom_call.1} parent=91 // pred_check
          %p547 = pneg %p102
        $region94: #{tpu_custom_call.1} parent=91 // pred_check_branch
          %549 = sbr.rel (%p547) target = $region96
        $region95: #{tpu_custom_call.1} parent=91 // pred_region
          _
        $region96: #{tpu_custom_call.1} parent=91 // pred_fallthru
          _
        %s550 = sand.u32 %s115, 1
        %s551 = sand.u32 %s115, 1
        %s552 = smul.addr %s551, 256
        %s553 = scalar_lea.vmem [#allocation4], %s552
        // Predicated region
        $region97: #{tpu_custom_call.1} parent=91 // pred_check
          %p554 = pneg %p128
        $region98: #{tpu_custom_call.1} parent=91 // pred_check_branch
          %556 = sbr.rel (%p554) target = $region100
        $region99: #{tpu_custom_call.1} parent=91 // pred_region
          _
        $region100: #{tpu_custom_call.1} parent=91 // pred_fallthru
          _
        %s557 = smul.u32 16, %s19
        %p558 = scmp.lt.s32.totalorder %s557, 63
        %s559 = scalar_select %p558, %s557, 63
        %s560 = smul.addr %s559, 8
        %s561 = scalar_lea.vmem %s0, %s560
        %p562 = pneg %p48
        %p563 = pneg %p45
        %s564 = smul.u32 2, %s20
        %p565 = scmp.lt.s32.totalorder %s564, 3
        %s566 = scalar_select %p565, %s564, 3
        %s567 = smul.addr %s566, 2
        %s568 = scalar_lea.vmem %s1, %s567
        %p569 = pneg %p74
        %p570 = pneg %p71
        %s571 = sand.u32 %s89, 1
        %s572 = sand.u32 %s89, 1
        %s573 = smul.addr %s572, 64
        %s574 = scalar_lea.vmem [#allocation3], %s573
        %p575 = pneg %p102
        %p576 = pneg %p99
        %s577 = sand.u32 %s115, 1
        %s578 = sand.u32 %s115, 1
        %s579 = smul.addr %s578, 256
        %s580 = scalar_lea.vmem [#allocation4], %s579
        %p581 = pneg %p128
        %p582 = pneg %p125
        %p583 = pneg %p154
        %p584 = pneg %p151
        %s585 = sand.u32 %s141, 1
        %s586 = sand.u32 %s141, 1
        %s587 = smul.addr %s586, 256
        %s588 = scalar_lea.vmem [#allocation5], %s587
        %s589 = smul.u32 16, %s19
        %p590 = scmp.lt.s32.totalorder %s589, 63
        %s591 = scalar_select %p590, %s589, 63
        %s592 = smul.addr %s591, 8
        %s593 = scalar_lea.vmem %s0, %s592
        %s594 = smul.u32 16, %s19
        %s595 = smul.u32 2, %s20
        %p596 = scmp.lt.s32.totalorder %s595, 3
        %s597 = scalar_select %p596, %s595, 3
        %s598 = smul.addr %s597, 2
        %s599 = scalar_lea.vmem %s1, %s598
        %s600 = smul.u32 2, %s20
        %s601 = smul.u32 4, %s19
        %s602 = smul.u32 2, %s20
        %s603 = smul.u32 32, %s20
        %s604 = smul.u32 16, %s19
        %p608 = scmp.eq.s32.totalorder %s20, 0
        // Predicated region
        $region101: #{tpu_custom_call.1} parent=91 // pred_check
          %p609 = pneg %p608
        $region102: #{tpu_custom_call.1} parent=91 // pred_check_branch
          %611 = sbr.rel (%p609) target = $region104
        $region103: #{tpu_custom_call.1} parent=91 // pred_region
          %vm612 = vcmask 138240
          %613 = vst.msk [vmem:[#allocation2] sm:$0xff] %vm612, 0.0
          %614 = vst.msk [vmem:[#allocation2 + $0x8] sm:$0xff] %vm612, 0.0
          %615 = vst.msk [vmem:[#allocation2 + $0x10] sm:$0xff] %vm612, 0.0
          %616 = vst.msk [vmem:[#allocation2 + $0x18] sm:$0xff] %vm612, 0.0
          %617 = vst.msk [vmem:[#allocation2 + $0x20] sm:$0xff] %vm612, 0.0
          %618 = vst.msk [vmem:[#allocation2 + $0x28] sm:$0xff] %vm612, 0.0
          %619 = vst.msk [vmem:[#allocation2 + $0x30] sm:$0xff] %vm612, 0.0
          %620 = vst.msk [vmem:[#allocation2 + $0x38] sm:$0xff] %vm612, 0.0
          %621 = vst.msk [vmem:[#allocation2 + $0x40] sm:$0xff] %vm612, 0.0
          %622 = vst.msk [vmem:[#allocation2 + $0x48] sm:$0xff] %vm612, 0.0
          %623 = vst.msk [vmem:[#allocation2 + $0x50] sm:$0xff] %vm612, 0.0
          %624 = vst.msk [vmem:[#allocation2 + $0x58] sm:$0xff] %vm612, 0.0
          %625 = vst.msk [vmem:[#allocation2 + $0x60] sm:$0xff] %vm612, 0.0
          %626 = vst.msk [vmem:[#allocation2 + $0x68] sm:$0xff] %vm612, 0.0
          %627 = vst.msk [vmem:[#allocation2 + $0x70] sm:$0xff] %vm612, 0.0
          %628 = vst.msk [vmem:[#allocation2 + $0x78] sm:$0xff] %vm612, 0.0
          %629 = vst.msk [vmem:[#allocation2 + $0x80] sm:$0xff] %vm612, 0.0
          %630 = vst.msk [vmem:[#allocation2 + $0x88] sm:$0xff] %vm612, 0.0
          %631 = vst.msk [vmem:[#allocation2 + $0x90] sm:$0xff] %vm612, 0.0
          %632 = vst.msk [vmem:[#allocation2 + $0x98] sm:$0xff] %vm612, 0.0
          %633 = vst.msk [vmem:[#allocation2 + $0xa0] sm:$0xff] %vm612, 0.0
          %634 = vst.msk [vmem:[#allocation2 + $0xa8] sm:$0xff] %vm612, 0.0
          %635 = vst.msk [vmem:[#allocation2 + $0xb0] sm:$0xff] %vm612, 0.0
          %636 = vst.msk [vmem:[#allocation2 + $0xb8] sm:$0xff] %vm612, 0.0
          %637 = vst.msk [vmem:[#allocation2 + $0xc0] sm:$0xff] %vm612, 0.0
          %638 = vst.msk [vmem:[#allocation2 + $0xc8] sm:$0xff] %vm612, 0.0
          %639 = vst.msk [vmem:[#allocation2 + $0xd0] sm:$0xff] %vm612, 0.0
          %640 = vst.msk [vmem:[#allocation2 + $0xd8] sm:$0xff] %vm612, 0.0
          %641 = vst.msk [vmem:[#allocation2 + $0xe0] sm:$0xff] %vm612, 0.0
          %642 = vst.msk [vmem:[#allocation2 + $0xe8] sm:$0xff] %vm612, 0.0
          %643 = vst.msk [vmem:[#allocation2 + $0xf0] sm:$0xff] %vm612, 0.0
          %644 = vst.msk [vmem:[#allocation2 + $0xf8] sm:$0xff] %vm612, 0.0
        $region104: #{tpu_custom_call.1} parent=91 // pred_fallthru
          _
        %v645 = vld [vmem:[%s546] sm:$0xff]
        %v646 = vld [vmem:[%s546 + $0x8] sm:$0xff]
        %v647 = vld [vmem:[%s546 + $0x10] sm:$0xff]
        %v648 = vld [vmem:[%s546 + $0x18] sm:$0xff]
        %v649 = vld [vmem:[%s546 + $0x20] sm:$0xff]
        %v650 = vld [vmem:[%s546 + $0x28] sm:$0xff]
        %v651 = vld [vmem:[%s546 + $0x30] sm:$0xff]
        %v652 = vld [vmem:[%s546 + $0x38] sm:$0xff]
        %vm653 = vnez %v645
        %vm654 = vnez %v646
        %vm655 = vnez %v647
        %vm656 = vnez %v648
        %vm657 = vnez %v649
        %vm658 = vnez %v650
        %vm659 = vnez %v651
        %vm660 = vnez %v652
        %v661 = vld [vmem:[%s593] sm:$0xff]
        %v662 = vld [vmem:[%s593 + $0x8] sm:$0xff]
        %v663 = vld [vmem:[%s593 + $0x10] sm:$0xff]
        %v664 = vld [vmem:[%s593 + $0x18] sm:$0xff]
        %v665 = vld [vmem:[%s593 + $0x20] sm:$0xff]
        %v666 = vld [vmem:[%s593 + $0x28] sm:$0xff]
        %v667 = vld [vmem:[%s593 + $0x30] sm:$0xff]
        %v668 = vld [vmem:[%s593 + $0x38] sm:$0xff]
        %v669 = vld [vmem:[%s593 + $0x40] sm:$0xff]
        %v670 = vld [vmem:[%s593 + $0x48] sm:$0xff]
        %v671 = vld [vmem:[%s593 + $0x50] sm:$0xff]
        %v672 = vld [vmem:[%s593 + $0x58] sm:$0xff]
        %v673 = vld [vmem:[%s593 + $0x60] sm:$0xff]
        %v674 = vld [vmem:[%s593 + $0x68] sm:$0xff]
        %v675 = vld [vmem:[%s593 + $0x70] sm:$0xff]
        %v676 = vld [vmem:[%s593 + $0x78] sm:$0xff]
        %v677 = vld [vmem:[%s599] sm:$0xf]
        %679 = vset.pattern.permute.xlu0 0
        %680 = vperm.xlu0 %679, %v661
        %v681 = vpop.permute.xlu0 %680
        %684 = vset.pattern.permute.xlu0 0
        %685 = vperm.xlu0 %684, %v662
        %v686 = vpop.permute.xlu0 %685
        %689 = vset.pattern.permute.xlu0 0
        %690 = vperm.xlu0 %689, %v663
        %v691 = vpop.permute.xlu0 %690
        %694 = vset.pattern.permute.xlu0 0
        %695 = vperm.xlu0 %694, %v664
        %v696 = vpop.permute.xlu0 %695
        %699 = vset.pattern.permute.xlu0 0
        %700 = vperm.xlu0 %699, %v665
        %v701 = vpop.permute.xlu0 %700
        %704 = vset.pattern.permute.xlu0 0
        %705 = vperm.xlu0 %704, %v666
        %v706 = vpop.permute.xlu0 %705
        %709 = vset.pattern.permute.xlu0 0
        %710 = vperm.xlu0 %709, %v667
        %v711 = vpop.permute.xlu0 %710
        %714 = vset.pattern.permute.xlu0 0
        %715 = vperm.xlu0 %714, %v668
        %v716 = vpop.permute.xlu0 %715
        %719 = vset.pattern.permute.xlu0 0
        %720 = vperm.xlu0 %719, %v669
        %v721 = vpop.permute.xlu0 %720
        %724 = vset.pattern.permute.xlu0 0
        %725 = vperm.xlu0 %724, %v670
        %v726 = vpop.permute.xlu0 %725
        %729 = vset.pattern.permute.xlu0 0
        %730 = vperm.xlu0 %729, %v671
        %v731 = vpop.permute.xlu0 %730
        %734 = vset.pattern.permute.xlu0 0
        %735 = vperm.xlu0 %734, %v672
        %v736 = vpop.permute.xlu0 %735
        %739 = vset.pattern.permute.xlu0 0
        %740 = vperm.xlu0 %739, %v673
        %v741 = vpop.permute.xlu0 %740
        %744 = vset.pattern.permute.xlu0 0
        %745 = vperm.xlu0 %744, %v674
        %v746 = vpop.permute.xlu0 %745
        %749 = vset.pattern.permute.xlu0 0
        %750 = vperm.xlu0 %749, %v675
        %v751 = vpop.permute.xlu0 %750
        %754 = vset.pattern.permute.xlu0 0
        %755 = vperm.xlu0 %754, %v676
        %v756 = vpop.permute.xlu0 %755
        %v759 = vlaneseq
        %v760 = vshrl.u32 %v759, 7
        %v761 = vsub.s32 0, %v760
        %v762 = vrot.slane %v677, %v761
        %v763 = vlaneseq
        %v764 = vshrl.u32 %v763, 7
        %v765 = vsub.s32 2, %v764
        %v766 = vrot.slane %v677, %v765
        %v769 = vlaneseq
        %v770 = vshrl.u32 %v769, 7
        %v771 = vsub.s32 0, %v770
        %v772 = vrot.slane %v762, %v771
        %v773 = vlaneseq
        %v774 = vshrl.u32 %v773, 7
        %v775 = vsub.s32 0, %v774
        %v776 = vrot.slane %v766, %v775
        %v777 = vadd.f32 %v681, %v772
        %v778 = vadd.f32 %v681, %v776
        %v779 = vadd.f32 %v686, %v772
        %v780 = vadd.f32 %v686, %v776
        %v781 = vadd.f32 %v691, %v772
        %v782 = vadd.f32 %v691, %v776
        %v783 = vadd.f32 %v696, %v772
        %v784 = vadd.f32 %v696, %v776
        %v785 = vadd.f32 %v701, %v772
        %v786 = vadd.f32 %v701, %v776
        %v787 = vadd.f32 %v706, %v772
        %v788 = vadd.f32 %v706, %v776
        %v789 = vadd.f32 %v711, %v772
        %v790 = vadd.f32 %v711, %v776
        %v791 = vadd.f32 %v716, %v772
        %v792 = vadd.f32 %v716, %v776
        %v793 = vadd.f32 %v721, %v772
        %v794 = vadd.f32 %v721, %v776
        %v795 = vadd.f32 %v726, %v772
        %v796 = vadd.f32 %v726, %v776
        %v797 = vadd.f32 %v731, %v772
        %v798 = vadd.f32 %v731, %v776
        %v799 = vadd.f32 %v736, %v772
        %v800 = vadd.f32 %v736, %v776
        %v801 = vadd.f32 %v741, %v772
        %v802 = vadd.f32 %v741, %v776
        %v803 = vadd.f32 %v746, %v772
        %v804 = vadd.f32 %v746, %v776
        %v805 = vadd.f32 %v751, %v772
        %v806 = vadd.f32 %v751, %v776
        %v807 = vadd.f32 %v756, %v772
        %v808 = vadd.f32 %v756, %v776
        %v809 = vmul.f32 %v777, 0.2
        %v810 = vmul.f32 %v778, 0.2
        %v811 = vmul.f32 %v779, 0.2
        %v812 = vmul.f32 %v780, 0.2
        %v813 = vmul.f32 %v781, 0.2
        %v814 = vmul.f32 %v782, 0.2
        %v815 = vmul.f32 %v783, 0.2
        %v816 = vmul.f32 %v784, 0.2
        %v817 = vmul.f32 %v785, 0.2
        %v818 = vmul.f32 %v786, 0.2
        %v819 = vmul.f32 %v787, 0.2
        %v820 = vmul.f32 %v788, 0.2
        %v821 = vmul.f32 %v789, 0.2
        %v822 = vmul.f32 %v790, 0.2
        %v823 = vmul.f32 %v791, 0.2
        %v824 = vmul.f32 %v792, 0.2
        %v825 = vmul.f32 %v793, 0.2
        %v826 = vmul.f32 %v794, 0.2
        %v827 = vmul.f32 %v795, 0.2
        %v828 = vmul.f32 %v796, 0.2
        %v829 = vmul.f32 %v797, 0.2
        %v830 = vmul.f32 %v798, 0.2
        %v831 = vmul.f32 %v799, 0.2
        %v832 = vmul.f32 %v800, 0.2
        %v833 = vmul.f32 %v801, 0.2
        %v834 = vmul.f32 %v802, 0.2
        %v835 = vmul.f32 %v803, 0.2
        %v836 = vmul.f32 %v804, 0.2
        %v837 = vmul.f32 %v805, 0.2
        %v838 = vmul.f32 %v806, 0.2
        %v839 = vmul.f32 %v807, 0.2
        %v840 = vmul.f32 %v808, 0.2
        %v841 = vmin.f32 %v777, %v809
        %v842 = vmin.f32 %v778, %v810
        %v843 = vmin.f32 %v779, %v811
        %v844 = vmin.f32 %v780, %v812
        %v845 = vmin.f32 %v781, %v813
        %v846 = vmin.f32 %v782, %v814
        %v847 = vmin.f32 %v783, %v815
        %v848 = vmin.f32 %v784, %v816
        %v849 = vmin.f32 %v785, %v817
        %v850 = vmin.f32 %v786, %v818
        %v851 = vmin.f32 %v787, %v819
        %v852 = vmin.f32 %v788, %v820
        %v853 = vmin.f32 %v789, %v821
        %v854 = vmin.f32 %v790, %v822
        %v855 = vmin.f32 %v791, %v823
        %v856 = vmin.f32 %v792, %v824
        %v857 = vmin.f32 %v793, %v825
        %v858 = vmin.f32 %v794, %v826
        %v859 = vmin.f32 %v795, %v827
        %v860 = vmin.f32 %v796, %v828
        %v861 = vmin.f32 %v797, %v829
        %v862 = vmin.f32 %v798, %v830
        %v863 = vmin.f32 %v799, %v831
        %v864 = vmin.f32 %v800, %v832
        %v865 = vmin.f32 %v801, %v833
        %v866 = vmin.f32 %v802, %v834
        %v867 = vmin.f32 %v803, %v835
        %v868 = vmin.f32 %v804, %v836
        %v869 = vmin.f32 %v805, %v837
        %v870 = vmin.f32 %v806, %v838
        %v871 = vmin.f32 %v807, %v839
        %v872 = vmin.f32 %v808, %v840
        %v873 = vsel %vm653, 16843009, 0
        %v874 = vsel %vm654, 16843009, 0
        %v875 = vsel %vm655, 16843009, 0
        %v876 = vsel %vm656, 16843009, 0
        %v877 = vsel %vm657, 16843009, 0
        %v878 = vsel %vm658, 16843009, 0
        %v879 = vsel %vm659, 16843009, 0
        %v880 = vsel %vm660, 16843009, 0
        %v881 = vunpack.c.0.s8 %v873
        %v882 = vunpack.c.0.s8 %v874
        %v883 = vunpack.c.1.s8 %v873
        %v884 = vunpack.c.1.s8 %v874
        %v885 = vunpack.c.2.s8 %v873
        %v886 = vunpack.c.2.s8 %v874
        %v887 = vunpack.c.3.s8 %v873
        %v888 = vunpack.c.3.s8 %v874
        %v889 = vunpack.c.0.s8 %v875
        %v890 = vunpack.c.0.s8 %v876
        %v891 = vunpack.c.1.s8 %v875
        %v892 = vunpack.c.1.s8 %v876
        %v893 = vunpack.c.2.s8 %v875
        %v894 = vunpack.c.2.s8 %v876
        %v895 = vunpack.c.3.s8 %v875
        %v896 = vunpack.c.3.s8 %v876
        %v897 = vunpack.c.0.s8 %v877
        %v898 = vunpack.c.0.s8 %v878
        %v899 = vunpack.c.1.s8 %v877
        %v900 = vunpack.c.1.s8 %v878
        %v901 = vunpack.c.2.s8 %v877
        %v902 = vunpack.c.2.s8 %v878
        %v903 = vunpack.c.3.s8 %v877
        %v904 = vunpack.c.3.s8 %v878
        %v905 = vunpack.c.0.s8 %v879
        %v906 = vunpack.c.0.s8 %v880
        %v907 = vunpack.c.1.s8 %v879
        %v908 = vunpack.c.1.s8 %v880
        %v909 = vunpack.c.2.s8 %v879
        %v910 = vunpack.c.2.s8 %v880
        %v911 = vunpack.c.3.s8 %v879
        %v912 = vunpack.c.3.s8 %v880
        %v913 = vpack.c.b16 %v882, %v881
        %v914 = vpack.c.b8 %v913, %v913
        %v915 = vpack.c.b16 %v884, %v883
        %v916 = vpack.c.b8 %v915, %v915
        %v917 = vpack.c.b16 %v886, %v885
        %v918 = vpack.c.b8 %v917, %v917
        %v919 = vpack.c.b16 %v888, %v887
        %v920 = vpack.c.b8 %v919, %v919
        %v921 = vpack.c.b16 %v890, %v889
        %v922 = vpack.c.b8 %v921, %v921
        %v923 = vpack.c.b16 %v892, %v891
        %v924 = vpack.c.b8 %v923, %v923
        %v925 = vpack.c.b16 %v894, %v893
        %v926 = vpack.c.b8 %v925, %v925
        %v927 = vpack.c.b16 %v896, %v895
        %v928 = vpack.c.b8 %v927, %v927
        %v929 = vpack.c.b16 %v898, %v897
        %v930 = vpack.c.b8 %v929, %v929
        %v931 = vpack.c.b16 %v900, %v899
        %v932 = vpack.c.b8 %v931, %v931
        %v933 = vpack.c.b16 %v902, %v901
        %v934 = vpack.c.b8 %v933, %v933
        %v935 = vpack.c.b16 %v904, %v903
        %v936 = vpack.c.b8 %v935, %v935
        %v937 = vpack.c.b16 %v906, %v905
        %v938 = vpack.c.b8 %v937, %v937
        %v939 = vpack.c.b16 %v908, %v907
        %v940 = vpack.c.b8 %v939, %v939
        %v941 = vpack.c.b16 %v910, %v909
        %v942 = vpack.c.b8 %v941, %v941
        %v943 = vpack.c.b16 %v912, %v911
        %v944 = vpack.c.b8 %v943, %v943
        %vm945 = vnez %v914
        %vm946 = vnez %v916
        %vm947 = vnez %v918
        %vm948 = vnez %v920
        %vm949 = vnez %v922
        %vm950 = vnez %v924
        %vm951 = vnez %v926
        %vm952 = vnez %v928
        %vm953 = vnez %v930
        %vm954 = vnez %v932
        %vm955 = vnez %v934
        %vm956 = vnez %v936
        %vm957 = vnez %v938
        %vm958 = vnez %v940
        %vm959 = vnez %v942
        %vm960 = vnez %v944
        %v961 = vsel %vm945, 16843009, 0
        %v962 = vsel %vm946, 16843009, 0
        %v963 = vsel %vm947, 16843009, 0
        %v964 = vsel %vm948, 16843009, 0
        %v965 = vsel %vm949, 16843009, 0
        %v966 = vsel %vm950, 16843009, 0
        %v967 = vsel %vm951, 16843009, 0
        %v968 = vsel %vm952, 16843009, 0
        %v969 = vsel %vm953, 16843009, 0
        %v970 = vsel %vm954, 16843009, 0
        %v971 = vsel %vm955, 16843009, 0
        %v972 = vsel %vm956, 16843009, 0
        %v973 = vsel %vm957, 16843009, 0
        %v974 = vsel %vm958, 16843009, 0
        %v975 = vsel %vm959, 16843009, 0
        %v976 = vsel %vm960, 16843009, 0
        %v977 = vunpack.c.0.s8 %v961
        %v978 = vunpack.c.1.s8 %v961
        %v979 = vunpack.c.0.s8 %v962
        %v980 = vunpack.c.1.s8 %v962
        %v981 = vunpack.c.0.s8 %v963
        %v982 = vunpack.c.1.s8 %v963
        %v983 = vunpack.c.0.s8 %v964
        %v984 = vunpack.c.1.s8 %v964
        %v985 = vunpack.c.0.s8 %v965
        %v986 = vunpack.c.1.s8 %v965
        %v987 = vunpack.c.0.s8 %v966
        %v988 = vunpack.c.1.s8 %v966
        %v989 = vunpack.c.0.s8 %v967
        %v990 = vunpack.c.1.s8 %v967
        %v991 = vunpack.c.0.s8 %v968
        %v992 = vunpack.c.1.s8 %v968
        %v993 = vunpack.c.0.s8 %v969
        %v994 = vunpack.c.1.s8 %v969
        %v995 = vunpack.c.0.s8 %v970
        %v996 = vunpack.c.1.s8 %v970
        %v997 = vunpack.c.0.s8 %v971
        %v998 = vunpack.c.1.s8 %v971
        %v999 = vunpack.c.0.s8 %v972
        %v1000 = vunpack.c.1.s8 %v972
        %v1001 = vunpack.c.0.s8 %v973
        %v1002 = vunpack.c.1.s8 %v973
        %v1003 = vunpack.c.0.s8 %v974
        %v1004 = vunpack.c.1.s8 %v974
        %v1005 = vunpack.c.0.s8 %v975
        %v1006 = vunpack.c.1.s8 %v975
        %v1007 = vunpack.c.0.s8 %v976
        %v1008 = vunpack.c.1.s8 %v976
        %vm1009 = vcmp.ne.s32.totalorder %v977, 0
        %vm1010 = vcmp.ne.s32.totalorder %v978, 0
        %vm1011 = vcmp.ne.s32.totalorder %v979, 0
        %vm1012 = vcmp.ne.s32.totalorder %v980, 0
        %vm1013 = vcmp.ne.s32.totalorder %v981, 0
        %vm1014 = vcmp.ne.s32.totalorder %v982, 0
        %vm1015 = vcmp.ne.s32.totalorder %v983, 0
        %vm1016 = vcmp.ne.s32.totalorder %v984, 0
        %vm1017 = vcmp.ne.s32.totalorder %v985, 0
        %vm1018 = vcmp.ne.s32.totalorder %v986, 0
        %vm1019 = vcmp.ne.s32.totalorder %v987, 0
        %vm1020 = vcmp.ne.s32.totalorder %v988, 0
        %vm1021 = vcmp.ne.s32.totalorder %v989, 0
        %vm1022 = vcmp.ne.s32.totalorder %v990, 0
        %vm1023 = vcmp.ne.s32.totalorder %v991, 0
        %vm1024 = vcmp.ne.s32.totalorder %v992, 0
        %vm1025 = vcmp.ne.s32.totalorder %v993, 0
        %vm1026 = vcmp.ne.s32.totalorder %v994, 0
        %vm1027 = vcmp.ne.s32.totalorder %v995, 0
        %vm1028 = vcmp.ne.s32.totalorder %v996, 0
        %vm1029 = vcmp.ne.s32.totalorder %v997, 0
        %vm1030 = vcmp.ne.s32.totalorder %v998, 0
        %vm1031 = vcmp.ne.s32.totalorder %v999, 0
        %vm1032 = vcmp.ne.s32.totalorder %v1000, 0
        %vm1033 = vcmp.ne.s32.totalorder %v1001, 0
        %vm1034 = vcmp.ne.s32.totalorder %v1002, 0
        %vm1035 = vcmp.ne.s32.totalorder %v1003, 0
        %vm1036 = vcmp.ne.s32.totalorder %v1004, 0
        %vm1037 = vcmp.ne.s32.totalorder %v1005, 0
        %vm1038 = vcmp.ne.s32.totalorder %v1006, 0
        %vm1039 = vcmp.ne.s32.totalorder %v1007, 0
        %vm1040 = vcmp.ne.s32.totalorder %v1008, 0
        %v1041 = vsel %vm1009, %v841, -1e+30
        %v1042 = vsel %vm1010, %v842, -1e+30
        %v1043 = vsel %vm1011, %v843, -1e+30
        %v1044 = vsel %vm1012, %v844, -1e+30
        %v1045 = vsel %vm1013, %v845, -1e+30
        %v1046 = vsel %vm1014, %v846, -1e+30
        %v1047 = vsel %vm1015, %v847, -1e+30
        %v1048 = vsel %vm1016, %v848, -1e+30
        %v1049 = vsel %vm1017, %v849, -1e+30
        %v1050 = vsel %vm1018, %v850, -1e+30
        %v1051 = vsel %vm1019, %v851, -1e+30
        %v1052 = vsel %vm1020, %v852, -1e+30
        %v1053 = vsel %vm1021, %v853, -1e+30
        %v1054 = vsel %vm1022, %v854, -1e+30
        %v1055 = vsel %vm1023, %v855, -1e+30
        %v1056 = vsel %vm1024, %v856, -1e+30
        %v1057 = vsel %vm1025, %v857, -1e+30
        %v1058 = vsel %vm1026, %v858, -1e+30
        %v1059 = vsel %vm1027, %v859, -1e+30
        %v1060 = vsel %vm1028, %v860, -1e+30
        %v1061 = vsel %vm1029, %v861, -1e+30
        %v1062 = vsel %vm1030, %v862, -1e+30
        %v1063 = vsel %vm1031, %v863, -1e+30
        %v1064 = vsel %vm1032, %v864, -1e+30
        %v1065 = vsel %vm1033, %v865, -1e+30
        %v1066 = vsel %vm1034, %v866, -1e+30
        %v1067 = vsel %vm1035, %v867, -1e+30
        %v1068 = vsel %vm1036, %v868, -1e+30
        %v1069 = vsel %vm1037, %v869, -1e+30
        %v1070 = vsel %vm1038, %v870, -1e+30
        %v1071 = vsel %vm1039, %v871, -1e+30
        %v1072 = vsel %vm1040, %v872, -1e+30
        %v1073 = vpack.c.bf16 %v1043, %v1041
        %v1074 = vpack.c.bf16 %v1044, %v1042
        %v1075 = vpack.c.bf16 %v1047, %v1045
        %v1076 = vpack.c.bf16 %v1048, %v1046
        %v1077 = vpack.c.bf16 %v1051, %v1049
        %v1078 = vpack.c.bf16 %v1052, %v1050
        %v1079 = vpack.c.bf16 %v1055, %v1053
        %v1080 = vpack.c.bf16 %v1056, %v1054
        %v1081 = vpack.c.bf16 %v1059, %v1057
        %v1082 = vpack.c.bf16 %v1060, %v1058
        %v1083 = vpack.c.bf16 %v1063, %v1061
        %v1084 = vpack.c.bf16 %v1064, %v1062
        %v1085 = vpack.c.bf16 %v1067, %v1065
        %v1086 = vpack.c.bf16 %v1068, %v1066
        %v1087 = vpack.c.bf16 %v1071, %v1069
        %v1088 = vpack.c.bf16 %v1072, %v1070
        %v1090 = vmul.bf16 %v1073, 1069105081
        %v1091 = vpow.bf16.pop %v1090
        %v1093 = vmul.bf16 %v1074, 1069105081
        %v1094 = vpow.bf16.pop %v1093
        %v1096 = vmul.bf16 %v1075, 1069105081
        %v1097 = vpow.bf16.pop %v1096
        %v1099 = vmul.bf16 %v1076, 1069105081
        %v1100 = vpow.bf16.pop %v1099
        %v1102 = vmul.bf16 %v1077, 1069105081
        %v1103 = vpow.bf16.pop %v1102
        %v1105 = vmul.bf16 %v1078, 1069105081
        %v1106 = vpow.bf16.pop %v1105
        %v1108 = vmul.bf16 %v1079, 1069105081
        %v1109 = vpow.bf16.pop %v1108
        %v1111 = vmul.bf16 %v1080, 1069105081
        %v1112 = vpow.bf16.pop %v1111
        %v1114 = vmul.bf16 %v1081, 1069105081
        %v1115 = vpow.bf16.pop %v1114
        %v1117 = vmul.bf16 %v1082, 1069105081
        %v1118 = vpow.bf16.pop %v1117
        %v1120 = vmul.bf16 %v1083, 1069105081
        %v1121 = vpow.bf16.pop %v1120
        %v1123 = vmul.bf16 %v1084, 1069105081
        %v1124 = vpow.bf16.pop %v1123
        %v1126 = vmul.bf16 %v1085, 1069105081
        %v1127 = vpow.bf16.pop %v1126
        %v1129 = vmul.bf16 %v1086, 1069105081
        %v1130 = vpow.bf16.pop %v1129
        %v1132 = vmul.bf16 %v1087, 1069105081
        %v1133 = vpow.bf16.pop %v1132
        %v1135 = vmul.bf16 %v1088, 1069105081
        %v1136 = vpow.bf16.pop %v1135
        %v1137 = vld [vmem:[#allocation2] sm:$0xff]
        %v1138 = vld [vmem:[#allocation2 + $0x8] sm:$0xff]
        %v1139 = vld [vmem:[#allocation2 + $0x10] sm:$0xff]
        %v1140 = vld [vmem:[#allocation2 + $0x18] sm:$0xff]
        %v1141 = vld [vmem:[#allocation2 + $0x20] sm:$0xff]
        %v1142 = vld [vmem:[#allocation2 + $0x28] sm:$0xff]
        %v1143 = vld [vmem:[#allocation2 + $0x30] sm:$0xff]
        %v1144 = vld [vmem:[#allocation2 + $0x38] sm:$0xff]
        %v1145 = vld [vmem:[#allocation2 + $0x40] sm:$0xff]
        %v1146 = vld [vmem:[#allocation2 + $0x48] sm:$0xff]
        %v1147 = vld [vmem:[#allocation2 + $0x50] sm:$0xff]
        %v1148 = vld [vmem:[#allocation2 + $0x58] sm:$0xff]
        %v1149 = vld [vmem:[#allocation2 + $0x60] sm:$0xff]
        %v1150 = vld [vmem:[#allocation2 + $0x68] sm:$0xff]
        %v1151 = vld [vmem:[#allocation2 + $0x70] sm:$0xff]
        %v1152 = vld [vmem:[#allocation2 + $0x78] sm:$0xff]
        %v1153 = vld [vmem:[%s553] sm:$0xf]
        %v1154 = vld [vmem:[%s553 + $0x4] sm:$0xf]
        %v1155 = vld [vmem:[%s553 + $0x8] sm:$0xf]
        %v1156 = vld [vmem:[%s553 + $0xc] sm:$0xf]
        %v1157 = vld [vmem:[%s553 + $0x10] sm:$0xf]
        %v1158 = vld [vmem:[%s553 + $0x14] sm:$0xf]
        %v1159 = vld [vmem:[%s553 + $0x18] sm:$0xf]
        %v1160 = vld [vmem:[%s553 + $0x1c] sm:$0xf]
        %v1161 = vld [vmem:[%s553 + $0x20] sm:$0xf]
        %v1162 = vld [vmem:[%s553 + $0x24] sm:$0xf]
        %v1163 = vld [vmem:[%s553 + $0x28] sm:$0xf]
        %v1164 = vld [vmem:[%s553 + $0x2c] sm:$0xf]
        %v1165 = vld [vmem:[%s553 + $0x30] sm:$0xf]
        %v1166 = vld [vmem:[%s553 + $0x34] sm:$0xf]
        %v1167 = vld [vmem:[%s553 + $0x38] sm:$0xf]
        %v1168 = vld [vmem:[%s553 + $0x3c] sm:$0xf]
        %v1169 = vld [vmem:[%s553 + $0x40] sm:$0xf]
        %v1170 = vld [vmem:[%s553 + $0x44] sm:$0xf]
        %v1171 = vld [vmem:[%s553 + $0x48] sm:$0xf]
        %v1172 = vld [vmem:[%s553 + $0x4c] sm:$0xf]
        %v1173 = vld [vmem:[%s553 + $0x50] sm:$0xf]
        %v1174 = vld [vmem:[%s553 + $0x54] sm:$0xf]
        %v1175 = vld [vmem:[%s553 + $0x58] sm:$0xf]
        %v1176 = vld [vmem:[%s553 + $0x5c] sm:$0xf]
        %v1177 = vld [vmem:[%s553 + $0x60] sm:$0xf]
        %v1178 = vld [vmem:[%s553 + $0x64] sm:$0xf]
        %v1179 = vld [vmem:[%s553 + $0x68] sm:$0xf]
        %v1180 = vld [vmem:[%s553 + $0x6c] sm:$0xf]
        %v1181 = vld [vmem:[%s553 + $0x70] sm:$0xf]
        %v1182 = vld [vmem:[%s553 + $0x74] sm:$0xf]
        %v1183 = vld [vmem:[%s553 + $0x78] sm:$0xf]
        %v1184 = vld [vmem:[%s553 + $0x7c] sm:$0xf]
        %v1217 = vunpack.c.l.b16 %v1153
        %v1218 = vunpack.c.l.b16 %v1154
        %v1219 = vunpack.c.l.b16 %v1155
        %v1220 = vunpack.c.l.b16 %v1156
        %v1221 = vunpack.c.l.b16 %v1157
        %v1222 = vunpack.c.l.b16 %v1158
        %v1223 = vunpack.c.l.b16 %v1159
        %v1224 = vunpack.c.l.b16 %v1160
        %v1225 = vunpack.c.l.b16 %v1161
        %v1226 = vunpack.c.l.b16 %v1162
        %v1227 = vunpack.c.l.b16 %v1163
        %v1228 = vunpack.c.l.b16 %v1164
        %v1229 = vunpack.c.l.b16 %v1165
        %v1230 = vunpack.c.l.b16 %v1166
        %v1231 = vunpack.c.l.b16 %v1167
        %v1232 = vunpack.c.l.b16 %v1168
        %v1233 = vunpack.c.l.b16 %v1169
        %v1234 = vunpack.c.l.b16 %v1170
        %v1235 = vunpack.c.l.b16 %v1171
        %v1236 = vunpack.c.l.b16 %v1172
        %v1237 = vunpack.c.l.b16 %v1173
        %v1238 = vunpack.c.l.b16 %v1174
        %v1239 = vunpack.c.l.b16 %v1175
        %v1240 = vunpack.c.l.b16 %v1176
        %v1241 = vunpack.c.l.b16 %v1177
        %v1242 = vunpack.c.l.b16 %v1178
        %v1243 = vunpack.c.l.b16 %v1179
        %v1244 = vunpack.c.l.b16 %v1180
        %v1245 = vunpack.c.l.b16 %v1181
        %v1246 = vunpack.c.l.b16 %v1182
        %v1247 = vunpack.c.l.b16 %v1183
        %v1248 = vunpack.c.l.b16 %v1184
        %v1249 = vpack.c.b16 %v1218, %v1217
        %v1250 = vpack.c.b16 %v1220, %v1219
        %v1251 = vpack.c.b16 %v1222, %v1221
        %v1252 = vpack.c.b16 %v1224, %v1223
        %v1253 = vpack.c.b16 %v1226, %v1225
        %v1254 = vpack.c.b16 %v1228, %v1227
        %v1255 = vpack.c.b16 %v1230, %v1229
        %v1256 = vpack.c.b16 %v1232, %v1231
        %v1257 = vpack.c.b16 %v1234, %v1233
        %v1258 = vpack.c.b16 %v1236, %v1235
        %v1259 = vpack.c.b16 %v1238, %v1237
        %v1260 = vpack.c.b16 %v1240, %v1239
        %v1261 = vpack.c.b16 %v1242, %v1241
        %v1262 = vpack.c.b16 %v1244, %v1243
        %v1263 = vpack.c.b16 %v1246, %v1245
        %v1264 = vpack.c.b16 %v1248, %v1247
        %1281 = vmatprep.subr.bf16.mxu0 0
        %1282 = vmatpush1.bf16.msra.mxu0 %v1249
        %1283 = vmatprep.subr.bf16.mxu0 0
        %1284 = vmatpush1.bf16.msra.mxu0 %v1250
        %1285 = vmatprep.subr.bf16.mxu0 0
        %1286 = vmatpush1.bf16.msra.mxu0 %v1251
        %1287 = vmatprep.subr.bf16.mxu0 0
        %1288 = vmatpush1.bf16.msra.mxu0 %v1252
        %1289 = vmatprep.subr.bf16.mxu0 0
        %1290 = vmatpush1.bf16.msra.mxu0 %v1253
        %1291 = vmatprep.subr.bf16.mxu0 0
        %1292 = vmatpush1.bf16.msra.mxu0 %v1254
        %1293 = vmatprep.subr.bf16.mxu0 0
        %1294 = vmatpush1.bf16.msra.mxu0 %v1255
        %1295 = vmatprep.subr.bf16.mxu0 0
        %1296 = vmatpush1.bf16.msra.mxu0 %v1256
        %1297 = vmatprep.subr.bf16.mxu0 0
        %1298 = vmatpush1.bf16.msra.mxu0 %v1257
        %1299 = vmatprep.subr.bf16.mxu0 0
        %1300 = vmatpush1.bf16.msra.mxu0 %v1258
        %1301 = vmatprep.subr.bf16.mxu0 0
        %1302 = vmatpush1.bf16.msra.mxu0 %v1259
        %1303 = vmatprep.subr.bf16.mxu0 0
        %1304 = vmatpush1.bf16.msra.mxu0 %v1260
        %1305 = vmatprep.subr.bf16.mxu0 0
        %1306 = vmatpush1.bf16.msra.mxu0 %v1261
        %1307 = vmatprep.subr.bf16.mxu0 0
        %1308 = vmatpush1.bf16.msra.mxu0 %v1262
        %1309 = vmatprep.subr.bf16.mxu0 0
        %1310 = vmatpush1.bf16.msra.mxu0 %v1263
        %1311 = vmatprep.subr.bf16.mxu0 0
        %1312 = vmatpush1.bf16.msra.mxu0 %v1264
        %1313 = vmatprep.mubr.bf16.mxu0 %v1094
        %1314 = vmatmul.mubr.bf16.gmra.mrb[0].mxu0 %v1091
        %v1315 = vpop.f32.mrb[0].mxu0
        %v1316 = vadd.f32 0.0, %v1315
        %v1317 = vpop.f32.mrb[0].mxu0
        %v1318 = vpop.f32.mrb[0].mxu0
        %v1319 = vadd.f32 0.0, %v1318
        %v1320 = vpop.f32.mrb[0].mxu0
        %1321 = vmatprep.mubr.bf16.mxu0 %v1100
        %1322 = vmatmul.mubr.bf16.gmra.mrb[0].mxu0 %v1097
        %v1323 = vpop.f32.mrb[0].mxu0
        %v1324 = vadd.f32 0.0, %v1323
        %v1325 = vpop.f32.mrb[0].mxu0
        %v1326 = vpop.f32.mrb[0].mxu0
        %v1327 = vadd.f32 0.0, %v1326
        %v1328 = vpop.f32.mrb[0].mxu0
        %1329 = vmatprep.mubr.bf16.mxu0 %v1106
        %1330 = vmatmul.mubr.bf16.gmra.mrb[0].mxu0 %v1103
        %v1331 = vpop.f32.mrb[0].mxu0
        %v1332 = vadd.f32 0.0, %v1331
        %v1333 = vpop.f32.mrb[0].mxu0
        %v1334 = vpop.f32.mrb[0].mxu0
        %v1335 = vadd.f32 0.0, %v1334
        %v1336 = vpop.f32.mrb[0].mxu0
        %1337 = vmatprep.mubr.bf16.mxu0 %v1112
        %1338 = vmatmul.mubr.bf16.gmra.mrb[0].mxu0 %v1109
        %v1339 = vpop.f32.mrb[0].mxu0
        %v1340 = vadd.f32 0.0, %v1339
        %v1341 = vpop.f32.mrb[0].mxu0
        %v1342 = vpop.f32.mrb[0].mxu0
        %v1343 = vadd.f32 0.0, %v1342
        %v1344 = vpop.f32.mrb[0].mxu0
        %1345 = vmatprep.mubr.bf16.mxu0 %v1118
        %1346 = vmatmul.mubr.bf16.gmra.mrb[0].mxu0 %v1115
        %v1347 = vpop.f32.mrb[0].mxu0
        %v1348 = vadd.f32 0.0, %v1347
        %v1349 = vpop.f32.mrb[0].mxu0
        %v1350 = vpop.f32.mrb[0].mxu0
        %v1351 = vadd.f32 0.0, %v1350
        %v1352 = vpop.f32.mrb[0].mxu0
        %1353 = vmatprep.mubr.bf16.mxu0 %v1124
        %1354 = vmatmul.mubr.bf16.gmra.mrb[0].mxu0 %v1121
        %v1355 = vpop.f32.mrb[0].mxu0
        %v1356 = vadd.f32 0.0, %v1355
        %v1357 = vpop.f32.mrb[0].mxu0
        %v1358 = vpop.f32.mrb[0].mxu0
        %v1359 = vadd.f32 0.0, %v1358
        %v1360 = vpop.f32.mrb[0].mxu0
        %1361 = vmatprep.mubr.bf16.mxu0 %v1130
        %1362 = vmatmul.mubr.bf16.gmra.mrb[0].mxu0 %v1127
        %v1363 = vpop.f32.mrb[0].mxu0
        %v1364 = vadd.f32 0.0, %v1363
        %v1365 = vpop.f32.mrb[0].mxu0
        %v1366 = vpop.f32.mrb[0].mxu0
        %v1367 = vadd.f32 0.0, %v1366
        %v1368 = vpop.f32.mrb[0].mxu0
        %1369 = vmatprep.mubr.bf16.mxu0 %v1136
        %1370 = vmatmul.mubr.bf16.gmra.mrb[0].mxu0 %v1133
        %v1371 = vpop.f32.mrb[0].mxu0
        %v1372 = vadd.f32 0.0, %v1371
        %v1373 = vpop.f32.mrb[0].mxu0
        %v1374 = vpop.f32.mrb[0].mxu0
        %v1375 = vadd.f32 0.0, %v1374
        %v1376 = vpop.f32.mrb[0].mxu0
        %1377 = vdwg.mxu0
        %v1378 = vadd.f32 %v1137, %v1316
        %v1379 = vadd.f32 %v1138, %v1319
        %v1380 = vadd.f32 %v1139, %v1324
        %v1381 = vadd.f32 %v1140, %v1327
        %v1382 = vadd.f32 %v1141, %v1332
        %v1383 = vadd.f32 %v1142, %v1335
        %v1384 = vadd.f32 %v1143, %v1340
        %v1385 = vadd.f32 %v1144, %v1343
        %v1386 = vadd.f32 %v1145, %v1348
        %v1387 = vadd.f32 %v1146, %v1351
        %v1388 = vadd.f32 %v1147, %v1356
        %v1389 = vadd.f32 %v1148, %v1359
        %v1390 = vadd.f32 %v1149, %v1364
        %v1391 = vadd.f32 %v1150, %v1367
        %v1392 = vadd.f32 %v1151, %v1372
        %v1393 = vadd.f32 %v1152, %v1375
        %vm1394 = vcmask 138240
        %1395 = vst.msk [vmem:[#allocation2] sm:$0xff] %vm1394, %v1378
        %1396 = vst.msk [vmem:[#allocation2 + $0x8] sm:$0xff] %vm1394, %v1379
        %1397 = vst.msk [vmem:[#allocation2 + $0x10] sm:$0xff] %vm1394, %v1380
        %1398 = vst.msk [vmem:[#allocation2 + $0x18] sm:$0xff] %vm1394, %v1381
        %1399 = vst.msk [vmem:[#allocation2 + $0x20] sm:$0xff] %vm1394, %v1382
        %1400 = vst.msk [vmem:[#allocation2 + $0x28] sm:$0xff] %vm1394, %v1383
        %1401 = vst.msk [vmem:[#allocation2 + $0x30] sm:$0xff] %vm1394, %v1384
        %1402 = vst.msk [vmem:[#allocation2 + $0x38] sm:$0xff] %vm1394, %v1385
        %1403 = vst.msk [vmem:[#allocation2 + $0x40] sm:$0xff] %vm1394, %v1386
        %1404 = vst.msk [vmem:[#allocation2 + $0x48] sm:$0xff] %vm1394, %v1387
        %1405 = vst.msk [vmem:[#allocation2 + $0x50] sm:$0xff] %vm1394, %v1388
        %1406 = vst.msk [vmem:[#allocation2 + $0x58] sm:$0xff] %vm1394, %v1389
        %1407 = vst.msk [vmem:[#allocation2 + $0x60] sm:$0xff] %vm1394, %v1390
        %1408 = vst.msk [vmem:[#allocation2 + $0x68] sm:$0xff] %vm1394, %v1391
        %1409 = vst.msk [vmem:[#allocation2 + $0x70] sm:$0xff] %vm1394, %v1392
        %1410 = vst.msk [vmem:[#allocation2 + $0x78] sm:$0xff] %vm1394, %v1393
        %1411 = vset.pattern.permute.xlu0 1
        %1412 = vperm.xlu0 %1411, %v661
        %v1413 = vpop.permute.xlu0 %1412
        %1415 = vset.pattern.permute.xlu0 1
        %1416 = vperm.xlu0 %1415, %v662
        %v1417 = vpop.permute.xlu0 %1416
        %1419 = vset.pattern.permute.xlu0 1
        %1420 = vperm.xlu0 %1419, %v663
        %v1421 = vpop.permute.xlu0 %1420
        %1423 = vset.pattern.permute.xlu0 1
        %1424 = vperm.xlu0 %1423, %v664
        %v1425 = vpop.permute.xlu0 %1424
        %1427 = vset.pattern.permute.xlu0 1
        %1428 = vperm.xlu0 %1427, %v665
        %v1429 = vpop.permute.xlu0 %1428
        %1431 = vset.pattern.permute.xlu0 1
        %1432 = vperm.xlu0 %1431, %v666
        %v1433 = vpop.permute.xlu0 %1432
        %1435 = vset.pattern.permute.xlu0 1
        %1436 = vperm.xlu0 %1435, %v667
        %v1437 = vpop.permute.xlu0 %1436
        %1439 = vset.pattern.permute.xlu0 1
        %1440 = vperm.xlu0 %1439, %v668
        %v1441 = vpop.permute.xlu0 %1440
        %1443 = vset.pattern.permute.xlu0 1
        %1444 = vperm.xlu0 %1443, %v669
        %v1445 = vpop.permute.xlu0 %1444
        %1447 = vset.pattern.permute.xlu0 1
        %1448 = vperm.xlu0 %1447, %v670
        %v1449 = vpop.permute.xlu0 %1448
        %1451 = vset.pattern.permute.xlu0 1
        %1452 = vperm.xlu0 %1451, %v671
        %v1453 = vpop.permute.xlu0 %1452
        %1455 = vset.pattern.permute.xlu0 1
        %1456 = vperm.xlu0 %1455, %v672
        %v1457 = vpop.permute.xlu0 %1456
        %1459 = vset.pattern.permute.xlu0 1
        %1460 = vperm.xlu0 %1459, %v673
        %v1461 = vpop.permute.xlu0 %1460
        %1463 = vset.pattern.permute.xlu0 1
        %1464 = vperm.xlu0 %1463, %v674
        %v1465 = vpop.permute.xlu0 %1464
        %1467 = vset.pattern.permute.xlu0 1
        %1468 = vperm.xlu0 %1467, %v675
        %v1469 = vpop.permute.xlu0 %1468
        %1471 = vset.pattern.permute.xlu0 1
        %1472 = vperm.xlu0 %1471, %v676
        %v1473 = vpop.permute.xlu0 %1472
        %v1475 = vlaneseq
        %v1476 = vshrl.u32 %v1475, 7
        %v1477 = vsub.s32 1, %v1476
        %v1478 = vrot.slane %v677, %v1477
        %v1479 = vlaneseq
        %v1480 = vshrl.u32 %v1479, 7
        %v1481 = vsub.s32 3, %v1480
        %v1482 = vrot.slane %v677, %v1481
        %v1485 = vlaneseq
        %v1486 = vshrl.u32 %v1485, 7
        %v1487 = vsub.s32 1, %v1486
        %v1488 = vrot.slane %v1478, %v1487
        %v1489 = vlaneseq
        %v1490 = vshrl.u32 %v1489, 7
        %v1491 = vsub.s32 1, %v1490
        %v1492 = vrot.slane %v1482, %v1491
        %v1493 = vadd.f32 %v1413, %v1488
        %v1494 = vadd.f32 %v1413, %v1492
        %v1495 = vadd.f32 %v1417, %v1488
        %v1496 = vadd.f32 %v1417, %v1492
        %v1497 = vadd.f32 %v1421, %v1488
        %v1498 = vadd.f32 %v1421, %v1492
        %v1499 = vadd.f32 %v1425, %v1488
        %v1500 = vadd.f32 %v1425, %v1492
        %v1501 = vadd.f32 %v1429, %v1488
        %v1502 = vadd.f32 %v1429, %v1492
        %v1503 = vadd.f32 %v1433, %v1488
        %v1504 = vadd.f32 %v1433, %v1492
        %v1505 = vadd.f32 %v1437, %v1488
        %v1506 = vadd.f32 %v1437, %v1492
        %v1507 = vadd.f32 %v1441, %v1488
        %v1508 = vadd.f32 %v1441, %v1492
        %v1509 = vadd.f32 %v1445, %v1488
        %v1510 = vadd.f32 %v1445, %v1492
        %v1511 = vadd.f32 %v1449, %v1488
        %v1512 = vadd.f32 %v1449, %v1492
        %v1513 = vadd.f32 %v1453, %v1488
        %v1514 = vadd.f32 %v1453, %v1492
        %v1515 = vadd.f32 %v1457, %v1488
        %v1516 = vadd.f32 %v1457, %v1492
        %v1517 = vadd.f32 %v1461, %v1488
        %v1518 = vadd.f32 %v1461, %v1492
        %v1519 = vadd.f32 %v1465, %v1488
        %v1520 = vadd.f32 %v1465, %v1492
        %v1521 = vadd.f32 %v1469, %v1488
        %v1522 = vadd.f32 %v1469, %v1492
        %v1523 = vadd.f32 %v1473, %v1488
        %v1524 = vadd.f32 %v1473, %v1492
        %v1525 = vmul.f32 %v1493, 0.2
        %v1526 = vmul.f32 %v1494, 0.2
        %v1527 = vmul.f32 %v1495, 0.2
        %v1528 = vmul.f32 %v1496, 0.2
        %v1529 = vmul.f32 %v1497, 0.2
        %v1530 = vmul.f32 %v1498, 0.2
        %v1531 = vmul.f32 %v1499, 0.2
        %v1532 = vmul.f32 %v1500, 0.2
        %v1533 = vmul.f32 %v1501, 0.2
        %v1534 = vmul.f32 %v1502, 0.2
        %v1535 = vmul.f32 %v1503, 0.2
        %v1536 = vmul.f32 %v1504, 0.2
        %v1537 = vmul.f32 %v1505, 0.2
        %v1538 = vmul.f32 %v1506, 0.2
        %v1539 = vmul.f32 %v1507, 0.2
        %v1540 = vmul.f32 %v1508, 0.2
        %v1541 = vmul.f32 %v1509, 0.2
        %v1542 = vmul.f32 %v1510, 0.2
        %v1543 = vmul.f32 %v1511, 0.2
        %v1544 = vmul.f32 %v1512, 0.2
        %v1545 = vmul.f32 %v1513, 0.2
        %v1546 = vmul.f32 %v1514, 0.2
        %v1547 = vmul.f32 %v1515, 0.2
        %v1548 = vmul.f32 %v1516, 0.2
        %v1549 = vmul.f32 %v1517, 0.2
        %v1550 = vmul.f32 %v1518, 0.2
        %v1551 = vmul.f32 %v1519, 0.2
        %v1552 = vmul.f32 %v1520, 0.2
        %v1553 = vmul.f32 %v1521, 0.2
        %v1554 = vmul.f32 %v1522, 0.2
        %v1555 = vmul.f32 %v1523, 0.2
        %v1556 = vmul.f32 %v1524, 0.2
        %v1557 = vmin.f32 %v1493, %v1525
        %v1558 = vmin.f32 %v1494, %v1526
        %v1559 = vmin.f32 %v1495, %v1527
        %v1560 = vmin.f32 %v1496, %v1528
        %v1561 = vmin.f32 %v1497, %v1529
        %v1562 = vmin.f32 %v1498, %v1530
        %v1563 = vmin.f32 %v1499, %v1531
        %v1564 = vmin.f32 %v1500, %v1532
        %v1565 = vmin.f32 %v1501, %v1533
        %v1566 = vmin.f32 %v1502, %v1534
        %v1567 = vmin.f32 %v1503, %v1535
        %v1568 = vmin.f32 %v1504, %v1536
        %v1569 = vmin.f32 %v1505, %v1537
        %v1570 = vmin.f32 %v1506, %v1538
        %v1571 = vmin.f32 %v1507, %v1539
        %v1572 = vmin.f32 %v1508, %v1540
        %v1573 = vmin.f32 %v1509, %v1541
        %v1574 = vmin.f32 %v1510, %v1542
        %v1575 = vmin.f32 %v1511, %v1543
        %v1576 = vmin.f32 %v1512, %v1544
        %v1577 = vmin.f32 %v1513, %v1545
        %v1578 = vmin.f32 %v1514, %v1546
        %v1579 = vmin.f32 %v1515, %v1547
        %v1580 = vmin.f32 %v1516, %v1548
        %v1581 = vmin.f32 %v1517, %v1549
        %v1582 = vmin.f32 %v1518, %v1550
        %v1583 = vmin.f32 %v1519, %v1551
        %v1584 = vmin.f32 %v1520, %v1552
        %v1585 = vmin.f32 %v1521, %v1553
        %v1586 = vmin.f32 %v1522, %v1554
        %v1587 = vmin.f32 %v1523, %v1555
        %v1588 = vmin.f32 %v1524, %v1556
        %v1589 = vsel %vm1009, %v1557, -1e+30
        %v1590 = vsel %vm1010, %v1558, -1e+30
        %v1591 = vsel %vm1011, %v1559, -1e+30
        %v1592 = vsel %vm1012, %v1560, -1e+30
        %v1593 = vsel %vm1013, %v1561, -1e+30
        %v1594 = vsel %vm1014, %v1562, -1e+30
        %v1595 = vsel %vm1015, %v1563, -1e+30
        %v1596 = vsel %vm1016, %v1564, -1e+30
        %v1597 = vsel %vm1017, %v1565, -1e+30
        %v1598 = vsel %vm1018, %v1566, -1e+30
        %v1599 = vsel %vm1019, %v1567, -1e+30
        %v1600 = vsel %vm1020, %v1568, -1e+30
        %v1601 = vsel %vm1021, %v1569, -1e+30
        %v1602 = vsel %vm1022, %v1570, -1e+30
        %v1603 = vsel %vm1023, %v1571, -1e+30
        %v1604 = vsel %vm1024, %v1572, -1e+30
        %v1605 = vsel %vm1025, %v1573, -1e+30
        %v1606 = vsel %vm1026, %v1574, -1e+30
        %v1607 = vsel %vm1027, %v1575, -1e+30
        %v1608 = vsel %vm1028, %v1576, -1e+30
        %v1609 = vsel %vm1029, %v1577, -1e+30
        %v1610 = vsel %vm1030, %v1578, -1e+30
        %v1611 = vsel %vm1031, %v1579, -1e+30
        %v1612 = vsel %vm1032, %v1580, -1e+30
        %v1613 = vsel %vm1033, %v1581, -1e+30
        %v1614 = vsel %vm1034, %v1582, -1e+30
        %v1615 = vsel %vm1035, %v1583, -1e+30
        %v1616 = vsel %vm1036, %v1584, -1e+30
        %v1617 = vsel %vm1037, %v1585, -1e+30
        %v1618 = vsel %vm1038, %v1586, -1e+30
        %v1619 = vsel %vm1039, %v1587, -1e+30
        %v1620 = vsel %vm1040, %v1588, -1e+30
        %v1621 = vpack.c.bf16 %v1591, %v1589
        %v1622 = vpack.c.bf16 %v1592, %v1590
        %v1623 = vpack.c.bf16 %v1595, %v1593
        %v1624 = vpack.c.bf16 %v1596, %v1594
        %v1625 = vpack.c.bf16 %v1599, %v1597
        %v1626 = vpack.c.bf16 %v1600, %v1598
        %v1627 = vpack.c.bf16 %v1603, %v1601
        %v1628 = vpack.c.bf16 %v1604, %v1602
        %v1629 = vpack.c.bf16 %v1607, %v1605
        %v1630 = vpack.c.bf16 %v1608, %v1606
        %v1631 = vpack.c.bf16 %v1611, %v1609
        %v1632 = vpack.c.bf16 %v1612, %v1610
        %v1633 = vpack.c.bf16 %v1615, %v1613
        %v1634 = vpack.c.bf16 %v1616, %v1614
        %v1635 = vpack.c.bf16 %v1619, %v1617
        %v1636 = vpack.c.bf16 %v1620, %v1618
        %v1638 = vmul.bf16 %v1621, 1069105081
        %v1639 = vpow.bf16.pop %v1638
        %v1641 = vmul.bf16 %v1622, 1069105081
        %v1642 = vpow.bf16.pop %v1641
        %v1644 = vmul.bf16 %v1623, 1069105081
        %v1645 = vpow.bf16.pop %v1644
        %v1647 = vmul.bf16 %v1624, 1069105081
        %v1648 = vpow.bf16.pop %v1647
        %v1650 = vmul.bf16 %v1625, 1069105081
        %v1651 = vpow.bf16.pop %v1650
        %v1653 = vmul.bf16 %v1626, 1069105081
        %v1654 = vpow.bf16.pop %v1653
        %v1656 = vmul.bf16 %v1627, 1069105081
        %v1657 = vpow.bf16.pop %v1656
        %v1659 = vmul.bf16 %v1628, 1069105081
        %v1660 = vpow.bf16.pop %v1659
        %v1662 = vmul.bf16 %v1629, 1069105081
        %v1663 = vpow.bf16.pop %v1662
        %v1665 = vmul.bf16 %v1630, 1069105081
        %v1666 = vpow.bf16.pop %v1665
        %v1668 = vmul.bf16 %v1631, 1069105081
        %v1669 = vpow.bf16.pop %v1668
        %v1671 = vmul.bf16 %v1632, 1069105081
        %v1672 = vpow.bf16.pop %v1671
        %v1674 = vmul.bf16 %v1633, 1069105081
        %v1675 = vpow.bf16.pop %v1674
        %v1677 = vmul.bf16 %v1634, 1069105081
        %v1678 = vpow.bf16.pop %v1677
        %v1680 = vmul.bf16 %v1635, 1069105081
        %v1681 = vpow.bf16.pop %v1680
        %v1683 = vmul.bf16 %v1636, 1069105081
        %v1684 = vpow.bf16.pop %v1683
        %s1685 = scalar_lea.vmem [#allocation2], 128
        %v1686 = vld [vmem:[%s1685] sm:$0xff]
        %v1687 = vld [vmem:[%s1685 + $0x8] sm:$0xff]
        %v1688 = vld [vmem:[%s1685 + $0x10] sm:$0xff]
        %v1689 = vld [vmem:[%s1685 + $0x18] sm:$0xff]
        %v1690 = vld [vmem:[%s1685 + $0x20] sm:$0xff]
        %v1691 = vld [vmem:[%s1685 + $0x28] sm:$0xff]
        %v1692 = vld [vmem:[%s1685 + $0x30] sm:$0xff]
        %v1693 = vld [vmem:[%s1685 + $0x38] sm:$0xff]
        %v1694 = vld [vmem:[%s1685 + $0x40] sm:$0xff]
        %v1695 = vld [vmem:[%s1685 + $0x48] sm:$0xff]
        %v1696 = vld [vmem:[%s1685 + $0x50] sm:$0xff]
        %v1697 = vld [vmem:[%s1685 + $0x58] sm:$0xff]
        %v1698 = vld [vmem:[%s1685 + $0x60] sm:$0xff]
        %v1699 = vld [vmem:[%s1685 + $0x68] sm:$0xff]
        %v1700 = vld [vmem:[%s1685 + $0x70] sm:$0xff]
        %v1701 = vld [vmem:[%s1685 + $0x78] sm:$0xff]
        %s1702 = scalar_lea.vmem %s553, 128 [#allocation4]
        %v1703 = vld [vmem:[%s1702] sm:$0xf]
        %v1704 = vld [vmem:[%s1702 + $0x4] sm:$0xf]
        %v1705 = vld [vmem:[%s1702 + $0x8] sm:$0xf]
        %v1706 = vld [vmem:[%s1702 + $0xc] sm:$0xf]
        %v1707 = vld [vmem:[%s1702 + $0x10] sm:$0xf]
        %v1708 = vld [vmem:[%s1702 + $0x14] sm:$0xf]
        %v1709 = vld [vmem:[%s1702 + $0x18] sm:$0xf]
        %v1710 = vld [vmem:[%s1702 + $0x1c] sm:$0xf]
        %v1711 = vld [vmem:[%s1702 + $0x20] sm:$0xf]
        %v1712 = vld [vmem:[%s1702 + $0x24] sm:$0xf]
        %v1713 = vld [vmem:[%s1702 + $0x28] sm:$0xf]
        %v1714 = vld [vmem:[%s1702 + $0x2c] sm:$0xf]
        %v1715 = vld [vmem:[%s1702 + $0x30] sm:$0xf]
        %v1716 = vld [vmem:[%s1702 + $0x34] sm:$0xf]
        %v1717 = vld [vmem:[%s1702 + $0x38] sm:$0xf]
        %v1718 = vld [vmem:[%s1702 + $0x3c] sm:$0xf]
        %v1719 = vld [vmem:[%s1702 + $0x40] sm:$0xf]
        %v1720 = vld [vmem:[%s1702 + $0x44] sm:$0xf]
        %v1721 = vld [vmem:[%s1702 + $0x48] sm:$0xf]
        %v1722 = vld [vmem:[%s1702 + $0x4c] sm:$0xf]
        %v1723 = vld [vmem:[%s1702 + $0x50] sm:$0xf]
        %v1724 = vld [vmem:[%s1702 + $0x54] sm:$0xf]
        %v1725 = vld [vmem:[%s1702 + $0x58] sm:$0xf]
        %v1726 = vld [vmem:[%s1702 + $0x5c] sm:$0xf]
        %v1727 = vld [vmem:[%s1702 + $0x60] sm:$0xf]
        %v1728 = vld [vmem:[%s1702 + $0x64] sm:$0xf]
        %v1729 = vld [vmem:[%s1702 + $0x68] sm:$0xf]
        %v1730 = vld [vmem:[%s1702 + $0x6c] sm:$0xf]
        %v1731 = vld [vmem:[%s1702 + $0x70] sm:$0xf]
        %v1732 = vld [vmem:[%s1702 + $0x74] sm:$0xf]
        %v1733 = vld [vmem:[%s1702 + $0x78] sm:$0xf]
        %v1734 = vld [vmem:[%s1702 + $0x7c] sm:$0xf]
        %v1767 = vunpack.c.l.b16 %v1703
        %v1768 = vunpack.c.l.b16 %v1704
        %v1769 = vunpack.c.l.b16 %v1705
        %v1770 = vunpack.c.l.b16 %v1706
        %v1771 = vunpack.c.l.b16 %v1707
        %v1772 = vunpack.c.l.b16 %v1708
        %v1773 = vunpack.c.l.b16 %v1709
        %v1774 = vunpack.c.l.b16 %v1710
        %v1775 = vunpack.c.l.b16 %v1711
        %v1776 = vunpack.c.l.b16 %v1712
        %v1777 = vunpack.c.l.b16 %v1713
        %v1778 = vunpack.c.l.b16 %v1714
        %v1779 = vunpack.c.l.b16 %v1715
        %v1780 = vunpack.c.l.b16 %v1716
        %v1781 = vunpack.c.l.b16 %v1717
        %v1782 = vunpack.c.l.b16 %v1718
        %v1783 = vunpack.c.l.b16 %v1719
        %v1784 = vunpack.c.l.b16 %v1720
        %v1785 = vunpack.c.l.b16 %v1721
        %v1786 = vunpack.c.l.b16 %v1722
        %v1787 = vunpack.c.l.b16 %v1723
        %v1788 = vunpack.c.l.b16 %v1724
        %v1789 = vunpack.c.l.b16 %v1725
        %v1790 = vunpack.c.l.b16 %v1726
        %v1791 = vunpack.c.l.b16 %v1727
        %v1792 = vunpack.c.l.b16 %v1728
        %v1793 = vunpack.c.l.b16 %v1729
        %v1794 = vunpack.c.l.b16 %v1730
        %v1795 = vunpack.c.l.b16 %v1731
        %v1796 = vunpack.c.l.b16 %v1732
        %v1797 = vunpack.c.l.b16 %v1733
        %v1798 = vunpack.c.l.b16 %v1734
        %v1799 = vpack.c.b16 %v1768, %v1767
        %v1800 = vpack.c.b16 %v1770, %v1769
        %v1801 = vpack.c.b16 %v1772, %v1771
        %v1802 = vpack.c.b16 %v1774, %v1773
        %v1803 = vpack.c.b16 %v1776, %v1775
        %v1804 = vpack.c.b16 %v1778, %v1777
        %v1805 = vpack.c.b16 %v1780, %v1779
        %v1806 = vpack.c.b16 %v1782, %v1781
        %v1807 = vpack.c.b16 %v1784, %v1783
        %v1808 = vpack.c.b16 %v1786, %v1785
        %v1809 = vpack.c.b16 %v1788, %v1787
        %v1810 = vpack.c.b16 %v1790, %v1789
        %v1811 = vpack.c.b16 %v1792, %v1791
        %v1812 = vpack.c.b16 %v1794, %v1793
        %v1813 = vpack.c.b16 %v1796, %v1795
        %v1814 = vpack.c.b16 %v1798, %v1797
        %1831 = vmatprep.subr.bf16.mxu0 0
        %1832 = vmatpush1.bf16.msra.mxu0 %v1799
        %1833 = vmatprep.subr.bf16.mxu0 0
        %1834 = vmatpush1.bf16.msra.mxu0 %v1800
        %1835 = vmatprep.subr.bf16.mxu0 0
        %1836 = vmatpush1.bf16.msra.mxu0 %v1801
        %1837 = vmatprep.subr.bf16.mxu0 0
        %1838 = vmatpush1.bf16.msra.mxu0 %v1802
        %1839 = vmatprep.subr.bf16.mxu0 0
        %1840 = vmatpush1.bf16.msra.mxu0 %v1803
        %1841 = vmatprep.subr.bf16.mxu0 0
        %1842 = vmatpush1.bf16.msra.mxu0 %v1804
        %1843 = vmatprep.subr.bf16.mxu0 0
        %1844 = vmatpush1.bf16.msra.mxu0 %v1805
        %1845 = vmatprep.subr.bf16.mxu0 0
        %1846 = vmatpush1.bf16.msra.mxu0 %v1806
        %1847 = vmatprep.subr.bf16.mxu0 0
        %1848 = vmatpush1.bf16.msra.mxu0 %v1807
        %1849 = vmatprep.subr.bf16.mxu0 0
        %1850 = vmatpush1.bf16.msra.mxu0 %v1808
        %1851 = vmatprep.subr.bf16.mxu0 0
        %1852 = vmatpush1.bf16.msra.mxu0 %v1809
        %1853 = vmatprep.subr.bf16.mxu0 0
        %1854 = vmatpush1.bf16.msra.mxu0 %v1810
        %1855 = vmatprep.subr.bf16.mxu0 0
        %1856 = vmatpush1.bf16.msra.mxu0 %v1811
        %1857 = vmatprep.subr.bf16.mxu0 0
        %1858 = vmatpush1.bf16.msra.mxu0 %v1812
        %1859 = vmatprep.subr.bf16.mxu0 0
        %1860 = vmatpush1.bf16.msra.mxu0 %v1813
        %1861 = vmatprep.subr.bf16.mxu0 0
        %1862 = vmatpush1.bf16.msra.mxu0 %v1814
        %1863 = vmatprep.mubr.bf16.mxu0 %v1642
        %1864 = vmatmul.mubr.bf16.gmra.mrb[0].mxu0 %v1639
        %v1865 = vpop.f32.mrb[0].mxu0
        %v1866 = vadd.f32 0.0, %v1865
        %v1867 = vpop.f32.mrb[0].mxu0
        %v1868 = vpop.f32.mrb[0].mxu0
        %v1869 = vadd.f32 0.0, %v1868
        %v1870 = vpop.f32.mrb[0].mxu0
        %1871 = vmatprep.mubr.bf16.mxu0 %v1648
        %1872 = vmatmul.mubr.bf16.gmra.mrb[0].mxu0 %v1645
        %v1873 = vpop.f32.mrb[0].mxu0
        %v1874 = vadd.f32 0.0, %v1873
        %v1875 = vpop.f32.mrb[0].mxu0
        %v1876 = vpop.f32.mrb[0].mxu0
        %v1877 = vadd.f32 0.0, %v1876
        %v1878 = vpop.f32.mrb[0].mxu0
        %1879 = vmatprep.mubr.bf16.mxu0 %v1654
        %1880 = vmatmul.mubr.bf16.gmra.mrb[0].mxu0 %v1651
        %v1881 = vpop.f32.mrb[0].mxu0
        %v1882 = vadd.f32 0.0, %v1881
        %v1883 = vpop.f32.mrb[0].mxu0
        %v1884 = vpop.f32.mrb[0].mxu0
        %v1885 = vadd.f32 0.0, %v1884
        %v1886 = vpop.f32.mrb[0].mxu0
        %1887 = vmatprep.mubr.bf16.mxu0 %v1660
        %1888 = vmatmul.mubr.bf16.gmra.mrb[0].mxu0 %v1657
        %v1889 = vpop.f32.mrb[0].mxu0
        %v1890 = vadd.f32 0.0, %v1889
        %v1891 = vpop.f32.mrb[0].mxu0
        %v1892 = vpop.f32.mrb[0].mxu0
        %v1893 = vadd.f32 0.0, %v1892
        %v1894 = vpop.f32.mrb[0].mxu0
        %1895 = vmatprep.mubr.bf16.mxu0 %v1666
        %1896 = vmatmul.mubr.bf16.gmra.mrb[0].mxu0 %v1663
        %v1897 = vpop.f32.mrb[0].mxu0
        %v1898 = vadd.f32 0.0, %v1897
        %v1899 = vpop.f32.mrb[0].mxu0
        %v1900 = vpop.f32.mrb[0].mxu0
        %v1901 = vadd.f32 0.0, %v1900
        %v1902 = vpop.f32.mrb[0].mxu0
        %1903 = vmatprep.mubr.bf16.mxu0 %v1672
        %1904 = vmatmul.mubr.bf16.gmra.mrb[0].mxu0 %v1669
        %v1905 = vpop.f32.mrb[0].mxu0
        %v1906 = vadd.f32 0.0, %v1905
        %v1907 = vpop.f32.mrb[0].mxu0
        %v1908 = vpop.f32.mrb[0].mxu0
        %v1909 = vadd.f32 0.0, %v1908
        %v1910 = vpop.f32.mrb[0].mxu0
        %1911 = vmatprep.mubr.bf16.mxu0 %v1678
        %1912 = vmatmul.mubr.bf16.gmra.mrb[0].mxu0 %v1675
        %v1913 = vpop.f32.mrb[0].mxu0
        %v1914 = vadd.f32 0.0, %v1913
        %v1915 = vpop.f32.mrb[0].mxu0
        %v1916 = vpop.f32.mrb[0].mxu0
        %v1917 = vadd.f32 0.0, %v1916
        %v1918 = vpop.f32.mrb[0].mxu0
        %1919 = vmatprep.mubr.bf16.mxu0 %v1684
        %1920 = vmatmul.mubr.bf16.gmra.mrb[0].mxu0 %v1681
        %v1921 = vpop.f32.mrb[0].mxu0
        %v1922 = vadd.f32 0.0, %v1921
        %v1923 = vpop.f32.mrb[0].mxu0
        %v1924 = vpop.f32.mrb[0].mxu0
        %v1925 = vadd.f32 0.0, %v1924
        %v1926 = vpop.f32.mrb[0].mxu0
        %1927 = vdwg.mxu0
        %v1928 = vadd.f32 %v1686, %v1866
        %v1929 = vadd.f32 %v1687, %v1869
        %v1930 = vadd.f32 %v1688, %v1874
        %v1931 = vadd.f32 %v1689, %v1877
        %v1932 = vadd.f32 %v1690, %v1882
        %v1933 = vadd.f32 %v1691, %v1885
        %v1934 = vadd.f32 %v1692, %v1890
        %v1935 = vadd.f32 %v1693, %v1893
        %v1936 = vadd.f32 %v1694, %v1898
        %v1937 = vadd.f32 %v1695, %v1901
        %v1938 = vadd.f32 %v1696, %v1906
        %v1939 = vadd.f32 %v1697, %v1909
        %v1940 = vadd.f32 %v1698, %v1914
        %v1941 = vadd.f32 %v1699, %v1917
        %v1942 = vadd.f32 %v1700, %v1922
        %v1943 = vadd.f32 %v1701, %v1925
        %1944 = vst.msk [vmem:[%s1685] sm:$0xff] %vm1394, %v1928
        %1945 = vst.msk [vmem:[%s1685 + $0x8] sm:$0xff] %vm1394, %v1929
        %1946 = vst.msk [vmem:[%s1685 + $0x10] sm:$0xff] %vm1394, %v1930
        %1947 = vst.msk [vmem:[%s1685 + $0x18] sm:$0xff] %vm1394, %v1931
        %1948 = vst.msk [vmem:[%s1685 + $0x20] sm:$0xff] %vm1394, %v1932
        %1949 = vst.msk [vmem:[%s1685 + $0x28] sm:$0xff] %vm1394, %v1933
        %1950 = vst.msk [vmem:[%s1685 + $0x30] sm:$0xff] %vm1394, %v1934
        %1951 = vst.msk [vmem:[%s1685 + $0x38] sm:$0xff] %vm1394, %v1935
        %1952 = vst.msk [vmem:[%s1685 + $0x40] sm:$0xff] %vm1394, %v1936
        %1953 = vst.msk [vmem:[%s1685 + $0x48] sm:$0xff] %vm1394, %v1937
        %1954 = vst.msk [vmem:[%s1685 + $0x50] sm:$0xff] %vm1394, %v1938
        %1955 = vst.msk [vmem:[%s1685 + $0x58] sm:$0xff] %vm1394, %v1939
        %1956 = vst.msk [vmem:[%s1685 + $0x60] sm:$0xff] %vm1394, %v1940
        %1957 = vst.msk [vmem:[%s1685 + $0x68] sm:$0xff] %vm1394, %v1941
        %1958 = vst.msk [vmem:[%s1685 + $0x70] sm:$0xff] %vm1394, %v1942
        %1959 = vst.msk [vmem:[%s1685 + $0x78] sm:$0xff] %vm1394, %v1943
        %p1960 = scmp.eq.s32.totalorder %s20, 1
        // Predicated region
        $region105: #{tpu_custom_call.1} parent=91 // pred_check
          %p1961 = pneg %p1960
        $region106: #{tpu_custom_call.1} parent=91 // pred_check_branch
          %1963 = sbr.rel (%p1961) target = $region108
        $region107: #{tpu_custom_call.1} parent=91 // pred_region
          %v1964 = vld [vmem:[#allocation2] sm:$0xff]
          %v1965 = vld [vmem:[#allocation2 + $0x8] sm:$0xff]
          %v1966 = vld [vmem:[#allocation2 + $0x10] sm:$0xff]
          %v1967 = vld [vmem:[#allocation2 + $0x18] sm:$0xff]
          %v1968 = vld [vmem:[#allocation2 + $0x20] sm:$0xff]
          %v1969 = vld [vmem:[#allocation2 + $0x28] sm:$0xff]
          %v1970 = vld [vmem:[#allocation2 + $0x30] sm:$0xff]
          %v1971 = vld [vmem:[#allocation2 + $0x38] sm:$0xff]
          %v1972 = vld [vmem:[#allocation2 + $0x40] sm:$0xff]
          %v1973 = vld [vmem:[#allocation2 + $0x48] sm:$0xff]
          %v1974 = vld [vmem:[#allocation2 + $0x50] sm:$0xff]
          %v1975 = vld [vmem:[#allocation2 + $0x58] sm:$0xff]
          %v1976 = vld [vmem:[#allocation2 + $0x60] sm:$0xff]
          %v1977 = vld [vmem:[#allocation2 + $0x68] sm:$0xff]
          %v1978 = vld [vmem:[#allocation2 + $0x70] sm:$0xff]
          %v1979 = vld [vmem:[#allocation2 + $0x78] sm:$0xff]
          %v1980 = vld [vmem:[#allocation2 + $0x80] sm:$0xff]
          %v1981 = vld [vmem:[#allocation2 + $0x88] sm:$0xff]
          %v1982 = vld [vmem:[#allocation2 + $0x90] sm:$0xff]
          %v1983 = vld [vmem:[#allocation2 + $0x98] sm:$0xff]
          %v1984 = vld [vmem:[#allocation2 + $0xa0] sm:$0xff]
          %v1985 = vld [vmem:[#allocation2 + $0xa8] sm:$0xff]
          %v1986 = vld [vmem:[#allocation2 + $0xb0] sm:$0xff]
          %v1987 = vld [vmem:[#allocation2 + $0xb8] sm:$0xff]
          %v1988 = vld [vmem:[#allocation2 + $0xc0] sm:$0xff]
          %v1989 = vld [vmem:[#allocation2 + $0xc8] sm:$0xff]
          %v1990 = vld [vmem:[#allocation2 + $0xd0] sm:$0xff]
          %v1991 = vld [vmem:[#allocation2 + $0xd8] sm:$0xff]
          %v1992 = vld [vmem:[#allocation2 + $0xe0] sm:$0xff]
          %v1993 = vld [vmem:[#allocation2 + $0xe8] sm:$0xff]
          %v1994 = vld [vmem:[#allocation2 + $0xf0] sm:$0xff]
          %v1995 = vld [vmem:[#allocation2 + $0xf8] sm:$0xff]
          %v1996 = vrcp.pop %v1964
          %v1997 = vrcp.pop %v1965
          %v1998 = vrcp.pop %v1966
          %v1999 = vrcp.pop %v1967
          %v2000 = vrcp.pop %v1968
          %v2001 = vrcp.pop %v1969
          %v2002 = vrcp.pop %v1970
          %v2003 = vrcp.pop %v1971
          %v2004 = vrcp.pop %v1972
          %v2005 = vrcp.pop %v1973
          %v2006 = vrcp.pop %v1974
          %v2007 = vrcp.pop %v1975
          %v2008 = vrcp.pop %v1976
          %v2009 = vrcp.pop %v1977
          %v2010 = vrcp.pop %v1978
          %v2011 = vrcp.pop %v1979
          %v2012 = vrcp.pop %v1980
          %v2013 = vrcp.pop %v1981
          %v2014 = vrcp.pop %v1982
          %v2015 = vrcp.pop %v1983
          %v2016 = vrcp.pop %v1984
          %v2017 = vrcp.pop %v1985
          %v2018 = vrcp.pop %v1986
          %v2019 = vrcp.pop %v1987
          %v2020 = vrcp.pop %v1988
          %v2021 = vrcp.pop %v1989
          %v2022 = vrcp.pop %v1990
          %v2023 = vrcp.pop %v1991
          %v2024 = vrcp.pop %v1992
          %v2025 = vrcp.pop %v1993
          %v2026 = vrcp.pop %v1994
          %v2027 = vrcp.pop %v1995
          %2029 = vset.pattern.permute.xlu0 16
          %2030 = vperm.xlu0 %2029, %v1996
          %v2031 = vpop.permute.xlu0 %2030
          %2034 = vset.pattern.permute.xlu0 16
          %2035 = vperm.xlu0 %2034, %v1997
          %v2036 = vpop.permute.xlu0 %2035
          %2039 = vset.pattern.permute.xlu0 16
          %2040 = vperm.xlu0 %2039, %v1998
          %v2041 = vpop.permute.xlu0 %2040
          %2044 = vset.pattern.permute.xlu0 16
          %2045 = vperm.xlu0 %2044, %v1999
          %v2046 = vpop.permute.xlu0 %2045
          %2049 = vset.pattern.permute.xlu0 16
          %2050 = vperm.xlu0 %2049, %v2000
          %v2051 = vpop.permute.xlu0 %2050
          %2054 = vset.pattern.permute.xlu0 16
          %2055 = vperm.xlu0 %2054, %v2001
          %v2056 = vpop.permute.xlu0 %2055
          %2059 = vset.pattern.permute.xlu0 16
          %2060 = vperm.xlu0 %2059, %v2002
          %v2061 = vpop.permute.xlu0 %2060
          %2064 = vset.pattern.permute.xlu0 16
          %2065 = vperm.xlu0 %2064, %v2003
          %v2066 = vpop.permute.xlu0 %2065
          %2069 = vset.pattern.permute.xlu0 16
          %2070 = vperm.xlu0 %2069, %v2004
          %v2071 = vpop.permute.xlu0 %2070
          %2074 = vset.pattern.permute.xlu0 16
          %2075 = vperm.xlu0 %2074, %v2005
          %v2076 = vpop.permute.xlu0 %2075
          %2079 = vset.pattern.permute.xlu0 16
          %2080 = vperm.xlu0 %2079, %v2006
          %v2081 = vpop.permute.xlu0 %2080
          %2084 = vset.pattern.permute.xlu0 16
          %2085 = vperm.xlu0 %2084, %v2007
          %v2086 = vpop.permute.xlu0 %2085
          %2089 = vset.pattern.permute.xlu0 16
          %2090 = vperm.xlu0 %2089, %v2008
          %v2091 = vpop.permute.xlu0 %2090
          %2094 = vset.pattern.permute.xlu0 16
          %2095 = vperm.xlu0 %2094, %v2009
          %v2096 = vpop.permute.xlu0 %2095
          %2099 = vset.pattern.permute.xlu0 16
          %2100 = vperm.xlu0 %2099, %v2010
          %v2101 = vpop.permute.xlu0 %2100
          %2104 = vset.pattern.permute.xlu0 16
          %2105 = vperm.xlu0 %2104, %v2011
          %v2106 = vpop.permute.xlu0 %2105
          %2109 = vset.pattern.permute.xlu0 16
          %2110 = vperm.xlu0 %2109, %v2012
          %v2111 = vpop.permute.xlu0 %2110
          %2114 = vset.pattern.permute.xlu0 16
          %2115 = vperm.xlu0 %2114, %v2013
          %v2116 = vpop.permute.xlu0 %2115
          %2119 = vset.pattern.permute.xlu0 16
          %2120 = vperm.xlu0 %2119, %v2014
          %v2121 = vpop.permute.xlu0 %2120
          %2124 = vset.pattern.permute.xlu0 16
          %2125 = vperm.xlu0 %2124, %v2015
          %v2126 = vpop.permute.xlu0 %2125
          %2129 = vset.pattern.permute.xlu0 16
          %2130 = vperm.xlu0 %2129, %v2016
          %v2131 = vpop.permute.xlu0 %2130
          %2134 = vset.pattern.permute.xlu0 16
          %2135 = vperm.xlu0 %2134, %v2017
          %v2136 = vpop.permute.xlu0 %2135
          %2139 = vset.pattern.permute.xlu0 16
          %2140 = vperm.xlu0 %2139, %v2018
          %v2141 = vpop.permute.xlu0 %2140
          %2144 = vset.pattern.permute.xlu0 16
          %2145 = vperm.xlu0 %2144, %v2019
          %v2146 = vpop.permute.xlu0 %2145
          %2149 = vset.pattern.permute.xlu0 16
          %2150 = vperm.xlu0 %2149, %v2020
          %v2151 = vpop.permute.xlu0 %2150
          %2154 = vset.pattern.permute.xlu0 16
          %2155 = vperm.xlu0 %2154, %v2021
          %v2156 = vpop.permute.xlu0 %2155
          %2159 = vset.pattern.permute.xlu0 16
          %2160 = vperm.xlu0 %2159, %v2022
          %v2161 = vpop.permute.xlu0 %2160
          %2164 = vset.pattern.permute.xlu0 16
          %2165 = vperm.xlu0 %2164, %v2023
          %v2166 = vpop.permute.xlu0 %2165
          %2169 = vset.pattern.permute.xlu0 16
          %2170 = vperm.xlu0 %2169, %v2024
          %v2171 = vpop.permute.xlu0 %2170
          %2174 = vset.pattern.permute.xlu0 16
          %2175 = vperm.xlu0 %2174, %v2025
          %v2176 = vpop.permute.xlu0 %2175
          %2179 = vset.pattern.permute.xlu0 16
          %2180 = vperm.xlu0 %2179, %v2026
          %v2181 = vpop.permute.xlu0 %2180
          %2184 = vset.pattern.permute.xlu0 16
          %2185 = vperm.xlu0 %2184, %v2027
          %v2186 = vpop.permute.xlu0 %2185
          %v2188 = vmul.f32 %v1964, %v2031
          %v2189 = vmul.f32 %v1965, %v2036
          %v2190 = vmul.f32 %v1966, %v2041
          %v2191 = vmul.f32 %v1967, %v2046
          %v2192 = vmul.f32 %v1968, %v2051
          %v2193 = vmul.f32 %v1969, %v2056
          %v2194 = vmul.f32 %v1970, %v2061
          %v2195 = vmul.f32 %v1971, %v2066
          %v2196 = vmul.f32 %v1972, %v2071
          %v2197 = vmul.f32 %v1973, %v2076
          %v2198 = vmul.f32 %v1974, %v2081
          %v2199 = vmul.f32 %v1975, %v2086
          %v2200 = vmul.f32 %v1976, %v2091
          %v2201 = vmul.f32 %v1977, %v2096
          %v2202 = vmul.f32 %v1978, %v2101
          %v2203 = vmul.f32 %v1979, %v2106
          %v2204 = vmul.f32 %v1980, %v2111
          %v2205 = vmul.f32 %v1981, %v2116
          %v2206 = vmul.f32 %v1982, %v2121
          %v2207 = vmul.f32 %v1983, %v2126
          %v2208 = vmul.f32 %v1984, %v2131
          %v2209 = vmul.f32 %v1985, %v2136
          %v2210 = vmul.f32 %v1986, %v2141
          %v2211 = vmul.f32 %v1987, %v2146
          %v2212 = vmul.f32 %v1988, %v2151
          %v2213 = vmul.f32 %v1989, %v2156
          %v2214 = vmul.f32 %v1990, %v2161
          %v2215 = vmul.f32 %v1991, %v2166
          %v2216 = vmul.f32 %v1992, %v2171
          %v2217 = vmul.f32 %v1993, %v2176
          %v2218 = vmul.f32 %v1994, %v2181
          %v2219 = vmul.f32 %v1995, %v2186
          %vm2220 = vcmask 130048
          %2221 = vst.msk [vmem:[%s588] sm:$0xff] %vm2220, %v2188
          %2222 = vst.msk [vmem:[%s588 + $0x8] sm:$0xff] %vm2220, %v2189
          %2223 = vst.msk [vmem:[%s588 + $0x10] sm:$0xff] %vm2220, %v2190
          %2224 = vst.msk [vmem:[%s588 + $0x18] sm:$0xff] %vm2220, %v2191
          %2225 = vst.msk [vmem:[%s588 + $0x20] sm:$0xff] %vm2220, %v2192
          %2226 = vst.msk [vmem:[%s588 + $0x28] sm:$0xff] %vm2220, %v2193
          %2227 = vst.msk [vmem:[%s588 + $0x30] sm:$0xff] %vm2220, %v2194
          %2228 = vst.msk [vmem:[%s588 + $0x38] sm:$0xff] %vm2220, %v2195
          %2229 = vst.msk [vmem:[%s588 + $0x40] sm:$0xff] %vm2220, %v2196
          %2230 = vst.msk [vmem:[%s588 + $0x48] sm:$0xff] %vm2220, %v2197
          %2231 = vst.msk [vmem:[%s588 + $0x50] sm:$0xff] %vm2220, %v2198
          %2232 = vst.msk [vmem:[%s588 + $0x58] sm:$0xff] %vm2220, %v2199
          %2233 = vst.msk [vmem:[%s588 + $0x60] sm:$0xff] %vm2220, %v2200
          %2234 = vst.msk [vmem:[%s588 + $0x68] sm:$0xff] %vm2220, %v2201
          %2235 = vst.msk [vmem:[%s588 + $0x70] sm:$0xff] %vm2220, %v2202
          %2236 = vst.msk [vmem:[%s588 + $0x78] sm:$0xff] %vm2220, %v2203
          %2237 = vst.msk [vmem:[%s588 + $0x80] sm:$0xff] %vm2220, %v2204
          %2238 = vst.msk [vmem:[%s588 + $0x88] sm:$0xff] %vm2220, %v2205
          %2239 = vst.msk [vmem:[%s588 + $0x90] sm:$0xff] %vm2220, %v2206
          %2240 = vst.msk [vmem:[%s588 + $0x98] sm:$0xff] %vm2220, %v2207
          %2241 = vst.msk [vmem:[%s588 + $0xa0] sm:$0xff] %vm2220, %v2208
          %2242 = vst.msk [vmem:[%s588 + $0xa8] sm:$0xff] %vm2220, %v2209
          %2243 = vst.msk [vmem:[%s588 + $0xb0] sm:$0xff] %vm2220, %v2210
          %2244 = vst.msk [vmem:[%s588 + $0xb8] sm:$0xff] %vm2220, %v2211
          %2245 = vst.msk [vmem:[%s588 + $0xc0] sm:$0xff] %vm2220, %v2212
          %2246 = vst.msk [vmem:[%s588 + $0xc8] sm:$0xff] %vm2220, %v2213
          %2247 = vst.msk [vmem:[%s588 + $0xd0] sm:$0xff] %vm2220, %v2214
          %2248 = vst.msk [vmem:[%s588 + $0xd8] sm:$0xff] %vm2220, %v2215
          %2249 = vst.msk [vmem:[%s588 + $0xe0] sm:$0xff] %vm2220, %v2216
          %2250 = vst.msk [vmem:[%s588 + $0xe8] sm:$0xff] %vm2220, %v2217
          %2251 = vst.msk [vmem:[%s588 + $0xf0] sm:$0xff] %vm2220, %v2218
          %2252 = vst.msk [vmem:[%s588 + $0xf8] sm:$0xff] %vm2220, %v2219
        $region108: #{tpu_custom_call.1} parent=91 // pred_fallthru
          _
        %s2253 = sand.u32 %s141, 1
        %s2254 = sand.u32 %s141, 1
        %s2255 = smul.addr %s2254, 256
        %s2256 = scalar_lea.vmem [#allocation5], %s2255
        // Predicated region
        $region109: #{tpu_custom_call.1} parent=91 // pred_check
          %p2257 = pneg %p151
        $region110: #{tpu_custom_call.1} parent=91 // pred_check_branch
          %2259 = sbr.rel (%p2257) target = $region112
        $region111: #{tpu_custom_call.1} parent=91 // pred_region
          %s2260 = smul.u32 16, %s19
          %s2261 = smul.addr %s2260, 8
          %s2262 = scalar_lea.vmem %s4, %s2261
          // Predicated region
          $region113: #{tpu_custom_call.1} parent=111 // pred_check
            _
          $region114: #{tpu_custom_call.1} parent=111 // pred_check_branch
            %2264 = sbr.rel (0) target = $region116
          $region115: #{tpu_custom_call.1} parent=111 // pred_region
            // Predicated region
            $region117: #{tpu_custom_call.1} parent=115 // pred_check
              _
            $region118: #{tpu_custom_call.1} parent=115 // pred_check_branch
              %2266 = sbr.rel (0) target = $region120
            $region119: #{tpu_custom_call.1} parent=115 // pred_region
              // Predicated region
              $region132: #{tpu_custom_call.1} parent=119 // pred_check
                _
              $region133: #{tpu_custom_call.1} parent=119 // pred_check_branch
                %2343 = sbr.rel (0) target = $region135
              $region134: #{tpu_custom_call.1} parent=119 // pred_region
                loop: start=0, step=1, limit=1
                $region136: #{tpu_custom_call.1} parent=134 // loop_pre_header
                  _
                $region137: #{tpu_custom_call.1} parent=134 // loop_header
                  %s2345 = sphi 0, %s2349
                  %p2346 = scmp.ge.s32.totalorder %s2345, 1
                  %s2350 = sphi %s2256, %s2256
                  %s2351 = sphi %s2262, %s2262
                $region138: #{tpu_custom_call.1} parent=134 // loop_header_branch
                  %2348 = sbr.rel (%p2346) target = $region142
                $region139: #{tpu_custom_call.1} parent=134 // loop_body
                  %v2352 = vld [vmem:[%s2350] sm:$0xff]
                  %2353 = vst [vmem:[%s2351] sm:$0xff] %v2352
                  %v2354 = vld [vmem:[%s2350 + $0x8] sm:$0xff]
                  %2355 = vst [vmem:[%s2351 + $0x8] sm:$0xff] %v2354
                  %v2356 = vld [vmem:[%s2350 + $0x10] sm:$0xff]
                  %2357 = vst [vmem:[%s2351 + $0x10] sm:$0xff] %v2356
                  %v2358 = vld [vmem:[%s2350 + $0x18] sm:$0xff]
                  %2359 = vst [vmem:[%s2351 + $0x18] sm:$0xff] %v2358
                  %v2360 = vld [vmem:[%s2350 + $0x20] sm:$0xff]
                  %2361 = vst [vmem:[%s2351 + $0x20] sm:$0xff] %v2360
                  %v2362 = vld [vmem:[%s2350 + $0x28] sm:$0xff]
                  %2363 = vst [vmem:[%s2351 + $0x28] sm:$0xff] %v2362
                  %v2364 = vld [vmem:[%s2350 + $0x30] sm:$0xff]
                  %2365 = vst [vmem:[%s2351 + $0x30] sm:$0xff] %v2364
                  %v2366 = vld [vmem:[%s2350 + $0x38] sm:$0xff]
                  %2367 = vst [vmem:[%s2351 + $0x38] sm:$0xff] %v2366
                  %v2368 = vld [vmem:[%s2350 + $0x40] sm:$0xff]
                  %2369 = vst [vmem:[%s2351 + $0x40] sm:$0xff] %v2368
                  %v2370 = vld [vmem:[%s2350 + $0x48] sm:$0xff]
                  %2371 = vst [vmem:[%s2351 + $0x48] sm:$0xff] %v2370
                  %v2372 = vld [vmem:[%s2350 + $0x50] sm:$0xff]
                  %2373 = vst [vmem:[%s2351 + $0x50] sm:$0xff] %v2372
                  %v2374 = vld [vmem:[%s2350 + $0x58] sm:$0xff]
                  %2375 = vst [vmem:[%s2351 + $0x58] sm:$0xff] %v2374
                  %v2376 = vld [vmem:[%s2350 + $0x60] sm:$0xff]
                  %2377 = vst [vmem:[%s2351 + $0x60] sm:$0xff] %v2376
                  %v2378 = vld [vmem:[%s2350 + $0x68] sm:$0xff]
                  %2379 = vst [vmem:[%s2351 + $0x68] sm:$0xff] %v2378
                  %v2380 = vld [vmem:[%s2350 + $0x70] sm:$0xff]
                  %2381 = vst [vmem:[%s2351 + $0x70] sm:$0xff] %v2380
                  %v2382 = vld [vmem:[%s2350 + $0x78] sm:$0xff]
                  %2383 = vst [vmem:[%s2351 + $0x78] sm:$0xff] %v2382
                  %v2384 = vld [vmem:[%s2350 + $0x80] sm:$0xff]
                  %2385 = vst [vmem:[%s2351 + $0x200] sm:$0xff] %v2384
                  %v2386 = vld [vmem:[%s2350 + $0x88] sm:$0xff]
                  %2387 = vst [vmem:[%s2351 + $0x208] sm:$0xff] %v2386
                  %v2388 = vld [vmem:[%s2350 + $0x90] sm:$0xff]
                  %2389 = vst [vmem:[%s2351 + $0x210] sm:$0xff] %v2388
                  %v2390 = vld [vmem:[%s2350 + $0x98] sm:$0xff]
                  %2391 = vst [vmem:[%s2351 + $0x218] sm:$0xff] %v2390
                  %v2392 = vld [vmem:[%s2350 + $0xa0] sm:$0xff]
                  %2393 = vst [vmem:[%s2351 + $0x220] sm:$0xff] %v2392
                  %v2394 = vld [vmem:[%s2350 + $0xa8] sm:$0xff]
                  %2395 = vst [vmem:[%s2351 + $0x228] sm:$0xff] %v2394
                  %v2396 = vld [vmem:[%s2350 + $0xb0] sm:$0xff]
                  %2397 = vst [vmem:[%s2351 + $0x230] sm:$0xff] %v2396
                  %v2398 = vld [vmem:[%s2350 + $0xb8] sm:$0xff]
                  %2399 = vst [vmem:[%s2351 + $0x238] sm:$0xff] %v2398
                  %v2400 = vld [vmem:[%s2350 + $0xc0] sm:$0xff]
                  %2401 = vst [vmem:[%s2351 + $0x240] sm:$0xff] %v2400
                  %v2402 = vld [vmem:[%s2350 + $0xc8] sm:$0xff]
                  %2403 = vst [vmem:[%s2351 + $0x248] sm:$0xff] %v2402
                  %v2404 = vld [vmem:[%s2350 + $0xd0] sm:$0xff]
                  %2405 = vst [vmem:[%s2351 + $0x250] sm:$0xff] %v2404
                  %v2406 = vld [vmem:[%s2350 + $0xd8] sm:$0xff]
                  %2407 = vst [vmem:[%s2351 + $0x258] sm:$0xff] %v2406
                  %v2408 = vld [vmem:[%s2350 + $0xe0] sm:$0xff]
                  %2409 = vst [vmem:[%s2351 + $0x260] sm:$0xff] %v2408
                  %v2410 = vld [vmem:[%s2350 + $0xe8] sm:$0xff]
                  %2411 = vst [vmem:[%s2351 + $0x268] sm:$0xff] %v2410
                  %v2412 = vld [vmem:[%s2350 + $0xf0] sm:$0xff]
                  %2413 = vst [vmem:[%s2351 + $0x270] sm:$0xff] %v2412
                  %v2414 = vld [vmem:[%s2350 + $0xf8] sm:$0xff]
                  %2415 = vst [vmem:[%s2351 + $0x278] sm:$0xff] %v2414
                $region140: #{tpu_custom_call.1} parent=134 // loop_footer
                  %s2349 = sadd.s32 1, %s2345
                $region141: #{tpu_custom_call.1} parent=134 // loop_footer_branch
                  %2344 = sbr.rel target = $region137
                $region142: #{tpu_custom_call.1} parent=134 // loop_exit
                  _
              $region135: #{tpu_custom_call.1} parent=119 // pred_fallthru
                _
              // Predicated region
              $region143: #{tpu_custom_call.1} parent=119 // pred_check
                _
              $region144: #{tpu_custom_call.1} parent=119 // pred_check_branch
                %2417 = sbr.rel target = $region146
              $region145: #{tpu_custom_call.1} parent=119 // pred_region
                _
              $region146: #{tpu_custom_call.1} parent=119 // pred_fallthru
                _
            $region120: #{tpu_custom_call.1} parent=115 // pred_fallthru
              _
            // Predicated region
            $region121: #{tpu_custom_call.1} parent=115 // pred_check
              _
            $region122: #{tpu_custom_call.1} parent=115 // pred_check_branch
              %2268 = sbr.rel target = $region124
            $region123: #{tpu_custom_call.1} parent=115 // pred_region
              loop: start=0, step=1, limit=1
              $region125: #{tpu_custom_call.1} parent=123 // loop_pre_header
                _
              $region126: #{tpu_custom_call.1} parent=123 // loop_header
                %s2271 = sphi 0, %s2275
                %p2272 = scmp.ge.s32.totalorder %s2271, 1
                %s2276 = sphi %s2256, %s2256
                %s2277 = sphi %s2262, %s2262
              $region127: #{tpu_custom_call.1} parent=123 // loop_header_branch
                %2274 = sbr.rel (%p2272) target = $region131
              $region128: #{tpu_custom_call.1} parent=123 // loop_body
                %v2278 = vld [vmem:[%s2276] sm:$0xff]
                %2279 = vst [vmem:[%s2277] sm:$0xff] %v2278
                %v2280 = vld [vmem:[%s2276 + $0x8] sm:$0xff]
                %2281 = vst [vmem:[%s2277 + $0x8] sm:$0xff] %v2280
                %v2282 = vld [vmem:[%s2276 + $0x10] sm:$0xff]
                %2283 = vst [vmem:[%s2277 + $0x10] sm:$0xff] %v2282
                %v2284 = vld [vmem:[%s2276 + $0x18] sm:$0xff]
                %2285 = vst [vmem:[%s2277 + $0x18] sm:$0xff] %v2284
                %v2286 = vld [vmem:[%s2276 + $0x20] sm:$0xff]
                %2287 = vst [vmem:[%s2277 + $0x20] sm:$0xff] %v2286
                %v2288 = vld [vmem:[%s2276 + $0x28] sm:$0xff]
                %2289 = vst [vmem:[%s2277 + $0x28] sm:$0xff] %v2288
                %v2290 = vld [vmem:[%s2276 + $0x30] sm:$0xff]
                %2291 = vst [vmem:[%s2277 + $0x30] sm:$0xff] %v2290
                %v2292 = vld [vmem:[%s2276 + $0x38] sm:$0xff]
                %2293 = vst [vmem:[%s2277 + $0x38] sm:$0xff] %v2292
                %v2294 = vld [vmem:[%s2276 + $0x40] sm:$0xff]
                %2295 = vst [vmem:[%s2277 + $0x40] sm:$0xff] %v2294
                %v2296 = vld [vmem:[%s2276 + $0x48] sm:$0xff]
                %2297 = vst [vmem:[%s2277 + $0x48] sm:$0xff] %v2296
                %v2298 = vld [vmem:[%s2276 + $0x50] sm:$0xff]
                %2299 = vst [vmem:[%s2277 + $0x50] sm:$0xff] %v2298
                %v2300 = vld [vmem:[%s2276 + $0x58] sm:$0xff]
                %2301 = vst [vmem:[%s2277 + $0x58] sm:$0xff] %v2300
                %v2302 = vld [vmem:[%s2276 + $0x60] sm:$0xff]
                %2303 = vst [vmem:[%s2277 + $0x60] sm:$0xff] %v2302
                %v2304 = vld [vmem:[%s2276 + $0x68] sm:$0xff]
                %2305 = vst [vmem:[%s2277 + $0x68] sm:$0xff] %v2304
                %v2306 = vld [vmem:[%s2276 + $0x70] sm:$0xff]
                %2307 = vst [vmem:[%s2277 + $0x70] sm:$0xff] %v2306
                %v2308 = vld [vmem:[%s2276 + $0x78] sm:$0xff]
                %2309 = vst [vmem:[%s2277 + $0x78] sm:$0xff] %v2308
                %v2310 = vld [vmem:[%s2276 + $0x80] sm:$0xff]
                %2311 = vst [vmem:[%s2277 + $0x200] sm:$0xff] %v2310
                %v2312 = vld [vmem:[%s2276 + $0x88] sm:$0xff]
                %2313 = vst [vmem:[%s2277 + $0x208] sm:$0xff] %v2312
                %v2314 = vld [vmem:[%s2276 + $0x90] sm:$0xff]
                %2315 = vst [vmem:[%s2277 + $0x210] sm:$0xff] %v2314
                %v2316 = vld [vmem:[%s2276 + $0x98] sm:$0xff]
                %2317 = vst [vmem:[%s2277 + $0x218] sm:$0xff] %v2316
                %v2318 = vld [vmem:[%s2276 + $0xa0] sm:$0xff]
                %2319 = vst [vmem:[%s2277 + $0x220] sm:$0xff] %v2318
                %v2320 = vld [vmem:[%s2276 + $0xa8] sm:$0xff]
                %2321 = vst [vmem:[%s2277 + $0x228] sm:$0xff] %v2320
                %v2322 = vld [vmem:[%s2276 + $0xb0] sm:$0xff]
                %2323 = vst [vmem:[%s2277 + $0x230] sm:$0xff] %v2322
                %v2324 = vld [vmem:[%s2276 + $0xb8] sm:$0xff]
                %2325 = vst [vmem:[%s2277 + $0x238] sm:$0xff] %v2324
                %v2326 = vld [vmem:[%s2276 + $0xc0] sm:$0xff]
                %2327 = vst [vmem:[%s2277 + $0x240] sm:$0xff] %v2326
                %v2328 = vld [vmem:[%s2276 + $0xc8] sm:$0xff]
                %2329 = vst [vmem:[%s2277 + $0x248] sm:$0xff] %v2328
                %v2330 = vld [vmem:[%s2276 + $0xd0] sm:$0xff]
                %2331 = vst [vmem:[%s2277 + $0x250] sm:$0xff] %v2330
                %v2332 = vld [vmem:[%s2276 + $0xd8] sm:$0xff]
                %2333 = vst [vmem:[%s2277 + $0x258] sm:$0xff] %v2332
                %v2334 = vld [vmem:[%s2276 + $0xe0] sm:$0xff]
                %2335 = vst [vmem:[%s2277 + $0x260] sm:$0xff] %v2334
                %v2336 = vld [vmem:[%s2276 + $0xe8] sm:$0xff]
                %2337 = vst [vmem:[%s2277 + $0x268] sm:$0xff] %v2336
                %v2338 = vld [vmem:[%s2276 + $0xf0] sm:$0xff]
                %2339 = vst [vmem:[%s2277 + $0x270] sm:$0xff] %v2338
                %v2340 = vld [vmem:[%s2276 + $0xf8] sm:$0xff]
                %2341 = vst [vmem:[%s2277 + $0x278] sm:$0xff] %v2340
              $region129: #{tpu_custom_call.1} parent=123 // loop_footer
                %s2275 = sadd.s32 1, %s2271
              $region130: #{tpu_custom_call.1} parent=123 // loop_footer_branch
                %2270 = sbr.rel target = $region126
              $region131: #{tpu_custom_call.1} parent=123 // loop_exit
                _
            $region124: #{tpu_custom_call.1} parent=115 // pred_fallthru
              _
          $region116: #{tpu_custom_call.1} parent=111 // pred_fallthru
            _
          %2418 = vnop
        $region112: #{tpu_custom_call.1} parent=91 // pred_fallthru
          _
      $region92: #{tpu_custom_call.1} parent=5 // pred_fallthru
        _
      %p2419 = scmp.le.s32.totalorder 2, %s10
      // Predicated region
      $region147: #{tpu_custom_call.1} parent=5 // pred_check
        %p2420 = pneg %p2419
      $region148: #{tpu_custom_call.1} parent=5 // pred_check_branch
        %2422 = sbr.rel (%p2420) target = $region150
      $region149: #{tpu_custom_call.1} parent=5 // pred_region
        %s2423 = ssub.s32 %s10, 2
        // Predicated region
        $region151: #{tpu_custom_call.1} parent=149 // pred_check
          %p2424 = pneg %p157
        $region152: #{tpu_custom_call.1} parent=149 // pred_check_branch
          %2426 = sbr.rel (%p2424) target = $region154
        $region153: #{tpu_custom_call.1} parent=149 // pred_region
          %s2427 = sand.u32 %s142, 1
          %s2428 = sand.u32 %s142, 1
          %s2429 = smul.addr %s2428, 256
          %s2430 = scalar_lea.vmem [#allocation5], %s2429
        $region154: #{tpu_custom_call.1} parent=149 // pred_fallthru
          _
      $region150: #{tpu_custom_call.1} parent=5 // pred_fallthru
        _
    $region6: #{tpu_custom_call.1} parent=1 // loop_footer
      %s14 = sadd.s32 1, %s10
    $region7: #{tpu_custom_call.1} parent=1 // loop_footer_branch
      %9 = sbr.rel target = $region3
    $region8: #{tpu_custom_call.1} parent=1 // loop_exit
      _

</llo_original>
